<compile_context>
chip_gen: v7x
topology: tpu7x:2x2x1
jax: 0.10.0
libtpu: 0.0.40
codegen_flags: <defaults>
</compile_context>

<pallas_src>
import functools
import math

import jax
import jax.numpy as jnp
from jax.experimental import pallas as pl
from jax.experimental.pallas import tpu as pltpu


def _round_up(x: int, m: int) -> int:
    return ((x + m - 1) // m) * m


def _embed_proto_kernel(x_ref, w1_ref, b1_ref, w2_ref, b2_ref,
                        onehot_t_ref, inv_counts_ref,
                        zq_ref, proto_ref, p2_ref, acc_ref, *, ns_pad):
    """Fused support+query embedding + prototypes. Grid axis = FEAT tiles."""
    k = pl.program_id(0)

    @pl.when(k == 0)
    def _():
        acc_ref[...] = jnp.zeros_like(acc_ref)

    # K-tiled first matmul: bf16 x bf16 -> fp32 accumulate on the MXU.
    acc_ref[...] += jnp.dot(x_ref[...], w1_ref[...],
                            preferred_element_type=jnp.float32)

    @pl.when(k == pl.num_programs(0) - 1)
    def _():
        h = jnp.maximum(acc_ref[...] + b1_ref[...], 0.0)
        z = jnp.dot(h.astype(jnp.bfloat16), w2_ref[...],
                    preferred_element_type=jnp.float32) + b2_ref[...]
        zs = z[:ns_pad, :]                       # support embeddings [Ns_p, Dp]
        zq_ref[...] = z[ns_pad:, :]              # query embeddings  [Nq_p, Dp]
        # Class prototypes: per-class mean of support embeddings (fp32).
        proto = jnp.dot(onehot_t_ref[...], zs,
                        preferred_element_type=jnp.float32) * inv_counts_ref[...]
        proto_ref[...] = proto
        # Tile-invariant ||proto||^2, hoisted out of the per-query-tile kernel.
        p2_ref[...] = jnp.sum(proto * proto, axis=-1)[None, :]


def _dist_kernel(zq_ref, proto_ref, p2_ref, out_ref):
    """-cdist(zq, proto) for one query tile; lane-dense [TQ, 128] output."""
    zq = zq_ref[...]
    q2 = jnp.sum(zq * zq, axis=-1, keepdims=True)                     # [TQ, 1]
    cross = jax.lax.dot_general(zq, proto_ref[...],
                                (((1,), (1,)), ((), ())),
                                preferred_element_type=jnp.float32)   # [TQ, NWp]
    d2 = jnp.maximum(q2 + p2_ref[...] - 2.0 * cross, 0.0)
    out_ref[...] = -jnp.sqrt(d2)


def prototypical_forward(support_images, support_labels, query_images, params,
                         n_way: int):
    """JAX wrapper: pad to hardware tiles, launch the two Pallas kernels."""
    w1, b1, w2, b2 = params
    f32, bf16 = jnp.float32, jnp.bfloat16

    # --- static sizes (Python ints from static shapes; no host syncs) ---
    ns = support_images.shape[0]
    nq = query_images.shape[0]
    feat = math.prod(support_images.shape[1:])
    d = w2.shape[1]

    DP = _round_up(d, 128)                       # padded embedding dim
    NWAY_P = _round_up(n_way, 128)               # padded class dim (lane-dense)
    TQ = min(128, max(8, _round_up(nq, 8)))      # query tile (sublane multiple)
    ns_pad = _round_up(ns, 8)
    # >= 2 query tiles so v7x's two TensorCores both get work on the grid.
    nq_pad = max(_round_up(nq, TQ), 2 * TQ)
    TK = 512                                     # FEAT reduction tile
    feat_pad = _round_up(feat, 128)
    if feat_pad <= TK:
        TK = feat_pad
    else:
        feat_pad = _round_up(feat_pad, TK)
    k_tiles = feat_pad // TK
    nt = ns_pad + nq_pad                         # fused embed row count

    # --- pad inputs / parameters (zero padding is semantics-preserving) ---
    xs = support_images.reshape(ns, feat).astype(f32)
    xq = query_images.reshape(nq, feat).astype(f32)
    xs = jnp.pad(xs, ((0, ns_pad - ns), (0, feat_pad - feat)))
    xq = jnp.pad(xq, ((0, nq_pad - nq), (0, feat_pad - feat)))
    x_all = jnp.concatenate([xs, xq], axis=0).astype(bf16)       # [NT, Fp]

    w1p = jnp.pad(w1.astype(f32), ((0, feat_pad - feat), (0, DP - d))).astype(bf16)
    b1p = jnp.pad(b1.astype(f32), ((0, 0), (0, DP - d)))
    w2p = jnp.pad(w2.astype(f32), ((0, DP - d), (0, DP - d))).astype(bf16)
    b2p = jnp.pad(b2.astype(f32), ((0, 0), (0, DP - d)))

    # one-hot^T [NWAY_P, Ns_p]; padded support rows get label -1 (match nothing),
    # padded class rows are all-zero so their prototypes are exactly 0.
    labels_pad = jnp.pad(support_labels.astype(jnp.int32), (0, ns_pad - ns),
                         constant_values=-1)
    onehot_t = (jnp.arange(NWAY_P, dtype=jnp.int32)[:, None]
                == labels_pad[None, :]).astype(f32)
    counts = jnp.sum(onehot_t, axis=1, keepdims=True)
    inv_counts = 1.0 / jnp.maximum(counts, 1.0)                  # no inf/nan

    # ---------------- kernel 1: fused embedding + prototypes ----------------
    cost1 = pl.CostEstimate(
        flops=2 * nt * feat_pad * DP + 2 * nt * DP * DP + 2 * NWAY_P * ns_pad * DP,
        transcendentals=0,
        bytes_accessed=(nt * feat_pad * 2 + feat_pad * DP * 2 + DP * DP * 2
                        + (2 * DP + NWAY_P * ns_pad + NWAY_P) * 4
                        + (nq_pad * DP + NWAY_P * DP + NWAY_P) * 4))

    zq_emb, proto, p2 = pl.pallas_call(
        functools.partial(_embed_proto_kernel, ns_pad=ns_pad),
        out_shape=(
            jax.ShapeDtypeStruct((nq_pad, DP), f32),
            jax.ShapeDtypeStruct((NWAY_P, DP), f32),
            jax.ShapeDtypeStruct((1, NWAY_P), f32),
        ),
        grid_spec=pltpu.PrefetchScalarGridSpec(
            num_scalar_prefetch=0,
            grid=(k_tiles,),
            in_specs=[
                pl.BlockSpec((nt, TK), lambda k: (0, k)),        # x (K-tiled)
                pl.BlockSpec((TK, DP), lambda k: (k, 0)),        # w1 (K-tiled)
                pl.BlockSpec((1, DP), lambda k: (0, 0)),         # b1
                pl.BlockSpec((DP, DP), lambda k: (0, 0)),        # w2
                pl.BlockSpec((1, DP), lambda k: (0, 0)),         # b2
                pl.BlockSpec((NWAY_P, ns_pad), lambda k: (0, 0)),  # one-hot^T
                pl.BlockSpec((NWAY_P, 1), lambda k: (0, 0)),     # 1/counts
            ],
            out_specs=[
                pl.BlockSpec((nq_pad, DP), lambda k: (0, 0)),
                pl.BlockSpec((NWAY_P, DP), lambda k: (0, 0)),
                pl.BlockSpec((1, NWAY_P), lambda k: (0, 0)),
            ],
            scratch_shapes=[pltpu.VMEM((nt, DP), f32)],
        ),
        compiler_params=pltpu.CompilerParams(
            dimension_semantics=("arbitrary",),
            vmem_limit_bytes=32 * 1024 * 1024),
        cost_estimate=cost1,
    )(x_all, w1p, b1p, w2p, b2p, onehot_t, inv_counts)

    # ---------------- kernel 2: -cdist(zq, proto), tiled over queries --------
    cost2 = pl.CostEstimate(
        flops=2 * nq_pad * DP * NWAY_P + 6 * nq_pad * NWAY_P,
        transcendentals=nq_pad * NWAY_P,
        bytes_accessed=(nq_pad * DP + NWAY_P * DP + NWAY_P + nq_pad * NWAY_P) * 4)

    scores_full = pl.pallas_call(
        _dist_kernel,
        out_shape=jax.ShapeDtypeStruct((nq_pad, NWAY_P), f32),
        grid_spec=pltpu.PrefetchScalarGridSpec(
            num_scalar_prefetch=0,
            grid=(nq_pad // TQ,),
            in_specs=[
                pl.BlockSpec((TQ, DP), lambda i: (i, 0)),        # query tile
                pl.BlockSpec((NWAY_P, DP), lambda i: (0, 0)),    # prototypes
                pl.BlockSpec((1, NWAY_P), lambda i: (0, 0)),     # ||proto||^2
            ],
            out_specs=pl.BlockSpec((TQ, NWAY_P), lambda i: (i, 0)),
        ),
        compiler_params=pltpu.CompilerParams(
            dimension_semantics=("parallel",),
            vmem_limit_bytes=32 * 1024 * 1024),
        cost_estimate=cost2,
    )(zq_emb, proto, p2)

    return scores_full[:nq, :n_way]


def _reference(support_images, support_labels, query_images, params, n_way):
    """Pure-JAX fp32 reference mirroring the PyTorch forward."""
    w1, b1, w2, b2 = params
    ns = support_images.shape[0]
    nq = query_images.shape[0]
    xs = support_images.reshape(ns, -1).astype(jnp.float32)
    xq = query_images.reshape(nq, -1).astype(jnp.float32)

    def embed(x):
        h = jnp.maximum(x @ w1 + b1, 0.0)
        return h @ w2 + b2

    zs = embed(xs)
    zq = embed(xq)
    protos = jnp.stack(
        [zs[support_labels == c].mean(axis=0) for c in range(n_way)], axis=0)
    diffs = zq[:, None, :] - protos[None, :, :]
    dists = jnp.sqrt(jnp.sum(diffs * diffs, axis=-1))
    return -dists


if __name__ == "__main__":
    key = jax.random.PRNGKey(0)
    k_sup, k_qry, k_w1, k_b1, k_w2, k_b2 = jax.random.split(key, 6)

    # Few-shot setup: n_way=2 classes, n_shot=4 support images each, 4 queries.
    N_WAY, N_SHOT, N_QUERY = 2, 4, 4
    C, H, W = 4, 16, 16
    FEAT = C * H * W
    D = 32  # embedding dim

    support_images = jax.random.normal(k_sup, (N_WAY * N_SHOT, C, H, W), jnp.float32)
    query_images = jax.random.normal(k_qry, (N_QUERY, C, H, W), jnp.float32)
    support_labels = jnp.repeat(jnp.arange(N_WAY, dtype=jnp.int32), N_SHOT)

    # Deterministic backbone parameters.
    w1 = jax.random.normal(k_w1, (FEAT, D), jnp.float32) / jnp.sqrt(FEAT)
    b1 = 0.01 * jax.random.normal(k_b1, (1, D), jnp.float32)
    w2 = jax.random.normal(k_w2, (D, D), jnp.float32) / jnp.sqrt(D)
    b2 = 0.01 * jax.random.normal(k_b2, (1, D), jnp.float32)
    params = (w1, b1, w2, b2)

    # n_way is static from how the episode was constructed (no host sync).
    n_way = N_WAY

    scores = prototypical_forward(support_images, support_labels, query_images,
                                  params, n_way)
    scores = jax.block_until_ready(scores)

    ref = _reference(support_images, support_labels, query_images, params, n_way)
    assert scores.shape == (N_QUERY, n_way)
    # bf16 MXU operands (fp32 accumulation / fp32 distance math) vs fp32 ref.
    assert jnp.allclose(scores, ref, rtol=2e-2, atol=5e-2), (
        f"max abs err {jnp.max(jnp.abs(scores - ref))}")

    print("KERNEL_OK")
</pallas_src>

<mosaic_0001>
module attributes {stable_mosaic.version = 11 : i64} {
  func.func @_embed_proto_kernel(%arg0: i32, %arg1: memref<24x512xbf16, #tpu.memory_space<vmem>>, %arg2: memref<512x128xbf16, #tpu.memory_space<vmem>>, %arg3: memref<1x128xf32, #tpu.memory_space<vmem>>, %arg4: memref<128x128xbf16, #tpu.memory_space<vmem>>, %arg5: memref<1x128xf32, #tpu.memory_space<vmem>>, %arg6: memref<128x8xf32, #tpu.memory_space<vmem>>, %arg7: memref<128x1xf32, #tpu.memory_space<vmem>>, %arg8: memref<16x128xf32, #tpu.memory_space<vmem>>, %arg9: memref<128x128xf32, #tpu.memory_space<vmem>>, %arg10: memref<1x128xf32, #tpu.memory_space<vmem>>, %arg11: memref<24x128xf32, #tpu.memory_space<vmem>>) attributes {dimension_semantics = [#tpu.dimension_semantics<arbitrary>], iteration_bounds = array<i64: 2>, scalar_prefetch = 0 : i64, scratch_operands = 1 : i64, tpu.core_type = #tpu.core_type<tc>, window_params = [{transform_indices = @transform_0, window_bounds = array<i64: 24, 512>}, {transform_indices = @transform_1, window_bounds = array<i64: 512, 128>}, {pipeline_mode = #tpu.pipeline_mode<synchronous>, transform_indices = @transform_2, window_bounds = array<i64: 1, 128>}, {pipeline_mode = #tpu.pipeline_mode<synchronous>, transform_indices = @transform_3, window_bounds = array<i64: 128, 128>}, {pipeline_mode = #tpu.pipeline_mode<synchronous>, transform_indices = @transform_4, window_bounds = array<i64: 1, 128>}, {pipeline_mode = #tpu.pipeline_mode<synchronous>, transform_indices = @transform_5, window_bounds = array<i64: 128, 8>}, {pipeline_mode = #tpu.pipeline_mode<synchronous>, transform_indices = @transform_6, window_bounds = array<i64: 128, 1>}, {pipeline_mode = #tpu.pipeline_mode<synchronous>, transform_indices = @transform_7, window_bounds = array<i64: 16, 128>}, {pipeline_mode = #tpu.pipeline_mode<synchronous>, transform_indices = @transform_8, window_bounds = array<i64: 128, 128>}, {pipeline_mode = #tpu.pipeline_mode<synchronous>, transform_indices = @transform_9, window_bounds = array<i64: 1, 128>}]} {
    %c0_i32 = arith.constant 0 : i32
    %0 = arith.cmpi eq, %arg0, %c0_i32 : i32
    %1 = arith.extui %0 : i1 to i32
    %c0_i32_0 = arith.constant 0 : i32
    %2 = arith.cmpi ne, %1, %c0_i32_0 : i32
    scf.if %2 {
      %cst_9 = arith.constant 0.000000e+00 : f32
      %12 = vector.broadcast %cst_9 : f32 to vector<24x128xf32>
      %c0_10 = arith.constant 0 : index
      %c0_11 = arith.constant 0 : index
      %13 = vector.load %arg11[%c0_10, %c0_11] : memref<24x128xf32, #tpu.memory_space<vmem>>, vector<24x128xf32>
      tpu.vector_store %arg11[%c0_10, %c0_11], %12 {strides = array<i32>} : memref<24x128xf32, #tpu.memory_space<vmem>>, vector<24x128xf32>,
    } else {
    }
    %c0 = arith.constant 0 : index
    %c0_1 = arith.constant 0 : index
    %3 = vector.load %arg11[%c0, %c0_1] : memref<24x128xf32, #tpu.memory_space<vmem>>, vector<24x128xf32>
    %c0_2 = arith.constant 0 : index
    %c0_3 = arith.constant 0 : index
    %4 = vector.load %arg1[%c0_2, %c0_3] : memref<24x512xbf16, #tpu.memory_space<vmem>>, vector<24x512xbf16>
    %c0_4 = arith.constant 0 : index
    %c0_5 = arith.constant 0 : index
    %5 = vector.load %arg2[%c0_4, %c0_5] : memref<512x128xbf16, #tpu.memory_space<vmem>>, vector<512x128xbf16>
    %cst = arith.constant dense<0.000000e+00> : vector<24x128xf32>
    %6 = tpu.matmul %4, %5, %cst {dimension_numbers = #tpu.dot_dimension_numbers<[1], [0], [0], [1], [0, 0, 1, 1], [], []>} : vector<24x512xbf16>, vector<512x128xbf16>, vector<24x128xf32> -> vector<24x128xf32>
    %7 = arith.addf %3, %6 : vector<24x128xf32>
    %c0_6 = arith.constant 0 : index
    %c0_7 = arith.constant 0 : index
    %8 = vector.load %arg11[%c0_6, %c0_7] : memref<24x128xf32, #tpu.memory_space<vmem>>, vector<24x128xf32>
    tpu.vector_store %arg11[%c0_6, %c0_7], %7 {strides = array<i32>} : memref<24x128xf32, #tpu.memory_space<vmem>>, vector<24x128xf32>,
    %c1_i32 = arith.constant 1 : i32
    %9 = arith.cmpi eq, %arg0, %c1_i32 : i32
    %10 = arith.extui %9 : i1 to i32
    %c0_i32_8 = arith.constant 0 : i32
    %11 = arith.cmpi ne, %10, %c0_i32_8 : i32
    scf.if %11 {
      %c0_9 = arith.constant 0 : index
      %c0_10 = arith.constant 0 : index
      %12 = vector.load %arg11[%c0_9, %c0_10] : memref<24x128xf32, #tpu.memory_space<vmem>>, vector<24x128xf32>
      %c0_11 = arith.constant 0 : index
      %c0_12 = arith.constant 0 : index
      %13 = vector.load %arg3[%c0_11, %c0_12] : memref<1x128xf32, #tpu.memory_space<vmem>>, vector<1x128xf32>
      %14 = vector.broadcast %13 : vector<1x128xf32> to vector<24x128xf32>
      %15 = arith.addf %12, %14 : vector<24x128xf32>
      %cst_13 = arith.constant 0.000000e+00 : f32
      %16 = vector.broadcast %cst_13 : f32 to vector<24x128xf32>
      %17 = arith.maximumf %15, %16 : vector<24x128xf32>
      %18 = arith.truncf %17 : vector<24x128xf32> to vector<24x128xbf16>
      %c0_14 = arith.constant 0 : index
      %c0_15 = arith.constant 0 : index
      %19 = vector.load %arg4[%c0_14, %c0_15] : memref<128x128xbf16, #tpu.memory_space<vmem>>, vector<128x128xbf16>
      %cst_16 = arith.constant dense<0.000000e+00> : vector<24x128xf32>
      %20 = tpu.matmul %18, %19, %cst_16 {dimension_numbers = #tpu.dot_dimension_numbers<[1], [0], [0], [1], [0, 0, 1, 1], [], []>} : vector<24x128xbf16>, vector<128x128xbf16>, vector<24x128xf32> -> vector<24x128xf32>
      %c0_17 = arith.constant 0 : index
      %c0_18 = arith.constant 0 : index
      %21 = vector.load %arg5[%c0_17, %c0_18] : memref<1x128xf32, #tpu.memory_space<vmem>>, vector<1x128xf32>
      %22 = vector.broadcast %21 : vector<1x128xf32> to vector<24x128xf32>
      %23 = arith.addf %20, %22 : vector<24x128xf32>
      %24 = vector.extract_strided_slice %23 {offsets = [0, 0], sizes = [8, 128], strides = [1, 1]} : vector<24x128xf32> to vector<8x128xf32>
      %25 = vector.extract_strided_slice %23 {offsets = [8, 0], sizes = [16, 128], strides = [1, 1]} : vector<24x128xf32> to vector<16x128xf32>
      %c0_19 = arith.constant 0 : index
      %c0_20 = arith.constant 0 : index
      %26 = vector.load %arg8[%c0_19, %c0_20] : memref<16x128xf32, #tpu.memory_space<vmem>>, vector<16x128xf32>
      tpu.vector_store %arg8[%c0_19, %c0_20], %25 {strides = array<i32>} : memref<16x128xf32, #tpu.memory_space<vmem>>, vector<16x128xf32>,
      %c0_21 = arith.constant 0 : index
      %c0_22 = arith.constant 0 : index
      %27 = vector.load %arg6[%c0_21, %c0_22] : memref<128x8xf32, #tpu.memory_space<vmem>>, vector<128x8xf32>
      %cst_23 = arith.constant dense<0.000000e+00> : vector<128x128xf32>
      %28 = tpu.matmul %27, %24, %cst_23 {dimension_numbers = #tpu.dot_dimension_numbers<[1], [0], [0], [1], [0, 0, 1, 1], [], []>} : vector<128x8xf32>, vector<8x128xf32>, vector<128x128xf32> -> vector<128x128xf32>
      %c0_24 = arith.constant 0 : index
      %c0_25 = arith.constant 0 : index
      %29 = vector.load %arg7[%c0_24, %c0_25] : memref<128x1xf32, #tpu.memory_space<vmem>>, vector<128x1xf32>
      %30 = vector.broadcast %29 : vector<128x1xf32> to vector<128x128xf32>
      %31 = arith.mulf %28, %30 : vector<128x128xf32>
      %c0_26 = arith.constant 0 : index
      %c0_27 = arith.constant 0 : index
      %32 = vector.load %arg9[%c0_26, %c0_27] : memref<128x128xf32, #tpu.memory_space<vmem>>, vector<128x128xf32>
      tpu.vector_store %arg9[%c0_26, %c0_27], %31 {strides = array<i32>} : memref<128x128xf32, #tpu.memory_space<vmem>>, vector<128x128xf32>,
      %33 = arith.mulf %31, %31 : vector<128x128xf32>
      %cst_28 = arith.constant dense<0.000000e+00> : vector<128xf32>
      %34 = vector.multi_reduction <add>, %33, %cst_28 [1] : vector<128x128xf32> to vector<128xf32>
      %35 = vector.shape_cast %34 : vector<128xf32> to vector<1x128xf32>
      %c0_29 = arith.constant 0 : index
      %c0_30 = arith.constant 0 : index
      %36 = vector.load %arg10[%c0_29, %c0_30] : memref<1x128xf32, #tpu.memory_space<vmem>>, vector<1x128xf32>
      tpu.vector_store %arg10[%c0_29, %c0_30], %35 {strides = array<i32>} : memref<1x128xf32, #tpu.memory_space<vmem>>, vector<1x128xf32>,
    } else {
    }
    return
  }
  func.func @transform_0(%arg0: i32) -> (i32, i32) {
    %c0_i32 = arith.constant 0 : i32
    %c0_i32_0 = arith.constant 0 : i32
    return %c0_i32, %arg0 : i32, i32
  }
  func.func @transform_1(%arg0: i32) -> (i32, i32) {
    %c0_i32 = arith.constant 0 : i32
    %c0_i32_0 = arith.constant 0 : i32
    return %arg0, %c0_i32 : i32, i32
  }
  func.func @transform_2(%arg0: i32) -> (i32, i32) {
    %c0_i32 = arith.constant 0 : i32
    %c0_i32_0 = arith.constant 0 : i32
    %c0_i32_1 = arith.constant 0 : i32
    return %c0_i32, %c0_i32_0 : i32, i32
  }
  func.func @transform_3(%arg0: i32) -> (i32, i32) {
    %c0_i32 = arith.constant 0 : i32
    %c0_i32_0 = arith.constant 0 : i32
    %c0_i32_1 = arith.constant 0 : i32
    return %c0_i32, %c0_i32_0 : i32, i32
  }
  func.func @transform_4(%arg0: i32) -> (i32, i32) {
    %c0_i32 = arith.constant 0 : i32
    %c0_i32_0 = arith.constant 0 : i32
    %c0_i32_1 = arith.constant 0 : i32
    return %c0_i32, %c0_i32_0 : i32, i32
  }
  func.func @transform_5(%arg0: i32) -> (i32, i32) {
    %c0_i32 = arith.constant 0 : i32
    %c0_i32_0 = arith.constant 0 : i32
    %c0_i32_1 = arith.constant 0 : i32
    return %c0_i32, %c0_i32_0 : i32, i32
  }
  func.func @transform_6(%arg0: i32) -> (i32, i32) {
    %c0_i32 = arith.constant 0 : i32
    %c0_i32_0 = arith.constant 0 : i32
    %c0_i32_1 = arith.constant 0 : i32
    return %c0_i32, %c0_i32_0 : i32, i32
  }
  func.func @transform_7(%arg0: i32) -> (i32, i32) {
    %c0_i32 = arith.constant 0 : i32
    %c0_i32_0 = arith.constant 0 : i32
    %c0_i32_1 = arith.constant 0 : i32
    return %c0_i32, %c0_i32_0 : i32, i32
  }
  func.func @transform_8(%arg0: i32) -> (i32, i32) {
    %c0_i32 = arith.constant 0 : i32
    %c0_i32_0 = arith.constant 0 : i32
    %c0_i32_1 = arith.constant 0 : i32
    return %c0_i32, %c0_i32_0 : i32, i32
  }
  func.func @transform_9(%arg0: i32) -> (i32, i32) {
    %c0_i32 = arith.constant 0 : i32
    %c0_i32_0 = arith.constant 0 : i32
    %c0_i32_1 = arith.constant 0 : i32
    return %c0_i32, %c0_i32_0 : i32, i32
  }
}

</mosaic_0001>

<llo_original>
// kernel: tpu_custom_call.1
$region0: #{tpu_custom_call.1}
  #allocation0 [shape = 'u32[]', space=smem, size = 0x4, offset = 0x4, fixed_abs, tag = 'smem constant byte address 0x4 - core index']
  #allocation1 [shape = 'u32[144,128]{1,0:T(1,128)}', space=vmem, size = 0x12000, scoped, tag = 'internal scratch']
  #allocation2 [shape = 'f32[24,128]{1,0:T(8,128)}', space=vmem, size = 0x3000, scoped, tag = 'scratch operand']
  %s0 = inlined_call_operand.vmem [shape: bf16[24,1024], index: 0, kind: input, shape index: {}]
  %s1 = inlined_call_operand.hbm [shape: bf16[1024,128], index: 1, kind: input, shape index: {}]
  %s2 = inlined_call_operand.vmem [shape: f32[1,128], index: 2, kind: input, shape index: {}]
  %s3 = inlined_call_operand.vmem [shape: bf16[128,128], index: 3, kind: input, shape index: {}]
  %s4 = inlined_call_operand.vmem [shape: f32[1,128], index: 4, kind: input, shape index: {}]
  %s5 = inlined_call_operand.vmem [shape: f32[128,8], index: 5, kind: input, shape index: {}]
  %s6 = inlined_call_operand.vmem [shape: f32[128,1], index: 6, kind: input, shape index: {}]
  %s7 = inlined_call_operand.hbm [shape: f32[16,128], index: 7, kind: output, shape index: {0}]
  %s8 = inlined_call_operand.hbm [shape: f32[128,128], index: 8, kind: output, shape index: {1}]
  %s9 = inlined_call_operand.hbm [shape: f32[1,128], index: 9, kind: output, shape index: {2}]
  %10 = xla_tuple %s7, %s8, %s9
  %s11 = sld [smem:[#allocation0]]
  $region112: #{tpu_custom_call.1} parent=0
    _
  %s13 = ssub.s32 1, %s11
  %s14 = scalar_select 0, %s13, %s11
  $region1: #{tpu_custom_call.1} parent=0
    #allocation3 [shape = 'u8[49152]{0}', space=vmem, size = 0xc000, scoped, tag = 'input window, operand 0']
    #allocation4 [shape = 'u8[262144]{0}', space=vmem, size = 0x40000, scoped, tag = 'input window, operand 1']
    #allocation5 [shape = 's32[2]{0}', space=sflag, size = 0x8, scoped, tag = 'scoped memory for tpu_custom_call.1']
    #allocation6 [shape = 's32[2]{0}', space=sflag, size = 0x8, scoped, tag = 'scoped memory for tpu_custom_call.1']
    #allocation7 [shape = 'u8[8192]{0}', space=vmem, size = 0x2000, scoped, tag = 'output window, operand 0, single buffered']
    #allocation8 [shape = 'u8[65536]{0}', space=vmem, size = 0x10000, scoped, tag = 'output window, operand 1, single buffered']
    #allocation9 [shape = 's32[1]{0}', space=sflag, size = 0x4, scoped, tag = 'scoped memory for tpu_custom_call.1']
    #allocation10 [shape = 'u8[512]{0}', space=vmem, size = 0x400, scoped, tag = 'output window, operand 2, single buffered']
    %15 = vsyncpa [#allocation5], 0
    %s16 = scalar_lea.sflag [#allocation5], 1
    %17 = vsyncpa %s16, 0
    %18 = vsyncpa [#allocation6], 0
    %19 = vsyncpa [#allocation9], 0
    loop: start=0, step=1, limit=4
    $region2: #{tpu_custom_call.1} parent=1 // loop_pre_header
      _
    $region3: #{tpu_custom_call.1} parent=1 // loop_header
      %s21 = sphi 0, %s25
      %p22 = scmp.ge.s32.totalorder %s21, 4
      %s31 = sphi 0, %s33
      %s34 = sphi 0, %s31
      %s35 = sphi 0, %s34
      %s51 = sphi 0, %s35
      %s57 = sphi 0, %s59
      %s60 = sphi 0, %s57
      %s61 = sphi 0, %s60
      %s77 = sphi 0, %s61
      %s81 = sphi 0, %s81
      %s83 = sphi 0, %s81
      %s84 = sphi 0, %s83
      %s98 = sphi 0, %s84
      %s102 = sphi 0, %s102
      %s104 = sphi 0, %s102
      %s105 = sphi 0, %s104
      %s119 = sphi 0, %s105
      %s123 = sphi 0, %s123
      %s125 = sphi 0, %s123
      %s126 = sphi 0, %s125
      %s140 = sphi 0, %s126
      %s144 = sphi 0, %s144
      %s146 = sphi 0, %s144
      %s147 = sphi 0, %s146
      %s161 = sphi 0, %s147
      %s165 = sphi 0, %s165
      %s167 = sphi 0, %s165
      %s168 = sphi 0, %s167
      %s182 = sphi 0, %s168
      %s186 = sphi 0, %s186
      %s188 = sphi 0, %s186
      %s189 = sphi 0, %s188
      %s203 = sphi 0, %s189
      %s207 = sphi 0, %s207
      %s209 = sphi 0, %s207
      %s210 = sphi 0, %s209
      %s224 = sphi 0, %s210
      %s228 = sphi 0, %s228
      %s230 = sphi 0, %s228
      %s231 = sphi 0, %s230
      %s245 = sphi 0, %s231
    $region4: #{tpu_custom_call.1} parent=1 // loop_header_branch
      %24 = sbr.rel (%p22) target = $region8
    $region5: #{tpu_custom_call.1} parent=1 // loop_body
      %s26 = ssub.s32 %s21, 1
      %s27 = ssub.s32 %s21, 2
      %s28 = sadd.s32 %s21, 1
      %s29 = ssub.s32 %s21, %s28
      %p30 = scmp.eq.s32.totalorder %s29, 0
      %s32 = sadd.s32 %s31, 1
      %s33 = scalar_select %p30, %s31, %s32
      %p36 = pneg %p30
      %p37 = scmp.eq.s32.totalorder %s21, 1
      %p38 = por %p36, %p37
      %p39 = scmp.ne.s32.totalorder %s31, %s34
      %p40 = scmp.eq.s32.totalorder %s21, 0
      %p41 = por %p39, %p40
      %p42 = scmp.ne.s32.totalorder %s31, %s34
      %p43 = scmp.eq.s32.totalorder %s26, 1
      %p44 = por %p42, %p43
      %p45 = scmp.ne.s32.totalorder %s34, %s35
      %p46 = scmp.eq.s32.totalorder %s26, 0
      %p47 = por %p45, %p46
      %p48 = scmp.ne.s32.totalorder %s34, %s35
      %p49 = scmp.eq.s32.totalorder %s27, 1
      %p50 = por %p48, %p49
      %p52 = scmp.ne.s32.totalorder %s35, %s51
      %p53 = scmp.eq.s32.totalorder %s27, 0
      %p54 = por %p52, %p53
      %s55 = ssub.s32 %s21, %s28
      %p56 = scmp.eq.s32.totalorder %s55, 0
      %s58 = sadd.s32 %s57, 1
      %s59 = scalar_select %p56, %s57, %s58
      %p62 = pneg %p56
      %p63 = scmp.eq.s32.totalorder %s21, 1
      %p64 = por %p62, %p63
      %p65 = scmp.ne.s32.totalorder %s57, %s60
      %p66 = scmp.eq.s32.totalorder %s21, 0
      %p67 = por %p65, %p66
      %p68 = scmp.ne.s32.totalorder %s57, %s60
      %p69 = scmp.eq.s32.totalorder %s26, 1
      %p70 = por %p68, %p69
      %p71 = scmp.ne.s32.totalorder %s60, %s61
      %p72 = scmp.eq.s32.totalorder %s26, 0
      %p73 = por %p71, %p72
      %p74 = scmp.ne.s32.totalorder %s60, %s61
      %p75 = scmp.eq.s32.totalorder %s27, 1
      %p76 = por %p74, %p75
      %p78 = scmp.ne.s32.totalorder %s61, %s77
      %p79 = scmp.eq.s32.totalorder %s27, 0
      %p80 = por %p78, %p79
      %s82 = sadd.s32 %s81, 1
      %p85 = scmp.eq.s32.totalorder %s21, 1
      %p86 = scmp.ne.s32.totalorder %s81, %s83
      %p87 = scmp.eq.s32.totalorder %s21, 0
      %p88 = por %p86, %p87
      %p89 = scmp.ne.s32.totalorder %s81, %s83
      %p90 = scmp.eq.s32.totalorder %s26, 1
      %p91 = por %p89, %p90
      %p92 = scmp.ne.s32.totalorder %s83, %s84
      %p93 = scmp.eq.s32.totalorder %s26, 0
      %p94 = por %p92, %p93
      %p95 = scmp.ne.s32.totalorder %s83, %s84
      %p96 = scmp.eq.s32.totalorder %s27, 1
      %p97 = por %p95, %p96
      %p99 = scmp.ne.s32.totalorder %s84, %s98
      %p100 = scmp.eq.s32.totalorder %s27, 0
      %p101 = por %p99, %p100
      %s103 = sadd.s32 %s102, 1
      %p106 = scmp.eq.s32.totalorder %s21, 1
      %p107 = scmp.ne.s32.totalorder %s102, %s104
      %p108 = scmp.eq.s32.totalorder %s21, 0
      %p109 = por %p107, %p108
      %p110 = scmp.ne.s32.totalorder %s102, %s104
      %p111 = scmp.eq.s32.totalorder %s26, 1
      %p112 = por %p110, %p111
      %p113 = scmp.ne.s32.totalorder %s104, %s105
      %p114 = scmp.eq.s32.totalorder %s26, 0
      %p115 = por %p113, %p114
      %p116 = scmp.ne.s32.totalorder %s104, %s105
      %p117 = scmp.eq.s32.totalorder %s27, 1
      %p118 = por %p116, %p117
      %p120 = scmp.ne.s32.totalorder %s105, %s119
      %p121 = scmp.eq.s32.totalorder %s27, 0
      %p122 = por %p120, %p121
      %s124 = sadd.s32 %s123, 1
      %p127 = scmp.eq.s32.totalorder %s21, 1
      %p128 = scmp.ne.s32.totalorder %s123, %s125
      %p129 = scmp.eq.s32.totalorder %s21, 0
      %p130 = por %p128, %p129
      %p131 = scmp.ne.s32.totalorder %s123, %s125
      %p132 = scmp.eq.s32.totalorder %s26, 1
      %p133 = por %p131, %p132
      %p134 = scmp.ne.s32.totalorder %s125, %s126
      %p135 = scmp.eq.s32.totalorder %s26, 0
      %p136 = por %p134, %p135
      %p137 = scmp.ne.s32.totalorder %s125, %s126
      %p138 = scmp.eq.s32.totalorder %s27, 1
      %p139 = por %p137, %p138
      %p141 = scmp.ne.s32.totalorder %s126, %s140
      %p142 = scmp.eq.s32.totalorder %s27, 0
      %p143 = por %p141, %p142
      %s145 = sadd.s32 %s144, 1
      %p148 = scmp.eq.s32.totalorder %s21, 1
      %p149 = scmp.ne.s32.totalorder %s144, %s146
      %p150 = scmp.eq.s32.totalorder %s21, 0
      %p151 = por %p149, %p150
      %p152 = scmp.ne.s32.totalorder %s144, %s146
      %p153 = scmp.eq.s32.totalorder %s26, 1
      %p154 = por %p152, %p153
      %p155 = scmp.ne.s32.totalorder %s146, %s147
      %p156 = scmp.eq.s32.totalorder %s26, 0
      %p157 = por %p155, %p156
      %p158 = scmp.ne.s32.totalorder %s146, %s147
      %p159 = scmp.eq.s32.totalorder %s27, 1
      %p160 = por %p158, %p159
      %p162 = scmp.ne.s32.totalorder %s147, %s161
      %p163 = scmp.eq.s32.totalorder %s27, 0
      %p164 = por %p162, %p163
      %s166 = sadd.s32 %s165, 1
      %p169 = scmp.eq.s32.totalorder %s21, 1
      %p170 = scmp.ne.s32.totalorder %s165, %s167
      %p171 = scmp.eq.s32.totalorder %s21, 0
      %p172 = por %p170, %p171
      %p173 = scmp.ne.s32.totalorder %s165, %s167
      %p174 = scmp.eq.s32.totalorder %s26, 1
      %p175 = por %p173, %p174
      %p176 = scmp.ne.s32.totalorder %s167, %s168
      %p177 = scmp.eq.s32.totalorder %s26, 0
      %p178 = por %p176, %p177
      %p179 = scmp.ne.s32.totalorder %s167, %s168
      %p180 = scmp.eq.s32.totalorder %s27, 1
      %p181 = por %p179, %p180
      %p183 = scmp.ne.s32.totalorder %s168, %s182
      %p184 = scmp.eq.s32.totalorder %s27, 0
      %p185 = por %p183, %p184
      %s187 = sadd.s32 %s186, 1
      %p190 = scmp.eq.s32.totalorder %s21, 1
      %p191 = scmp.ne.s32.totalorder %s186, %s188
      %p192 = scmp.eq.s32.totalorder %s21, 0
      %p193 = por %p191, %p192
      %p194 = scmp.ne.s32.totalorder %s186, %s188
      %p195 = scmp.eq.s32.totalorder %s26, 1
      %p196 = por %p194, %p195
      %p197 = scmp.ne.s32.totalorder %s188, %s189
      %p198 = scmp.eq.s32.totalorder %s26, 0
      %p199 = por %p197, %p198
      %p200 = scmp.ne.s32.totalorder %s188, %s189
      %p201 = scmp.eq.s32.totalorder %s27, 1
      %p202 = por %p200, %p201
      %p204 = scmp.ne.s32.totalorder %s189, %s203
      %p205 = scmp.eq.s32.totalorder %s27, 0
      %p206 = por %p204, %p205
      %s208 = sadd.s32 %s207, 1
      %p211 = scmp.eq.s32.totalorder %s21, 1
      %p212 = scmp.ne.s32.totalorder %s207, %s209
      %p213 = scmp.eq.s32.totalorder %s21, 0
      %p214 = por %p212, %p213
      %p215 = scmp.ne.s32.totalorder %s207, %s209
      %p216 = scmp.eq.s32.totalorder %s26, 1
      %p217 = por %p215, %p216
      %p218 = scmp.ne.s32.totalorder %s209, %s210
      %p219 = scmp.eq.s32.totalorder %s26, 0
      %p220 = por %p218, %p219
      %p221 = scmp.ne.s32.totalorder %s209, %s210
      %p222 = scmp.eq.s32.totalorder %s27, 1
      %p223 = por %p221, %p222
      %p225 = scmp.ne.s32.totalorder %s210, %s224
      %p226 = scmp.eq.s32.totalorder %s27, 0
      %p227 = por %p225, %p226
      %s229 = sadd.s32 %s228, 1
      %p232 = scmp.eq.s32.totalorder %s21, 1
      %p233 = scmp.ne.s32.totalorder %s228, %s230
      %p234 = scmp.eq.s32.totalorder %s21, 0
      %p235 = por %p233, %p234
      %p236 = scmp.ne.s32.totalorder %s228, %s230
      %p237 = scmp.eq.s32.totalorder %s26, 1
      %p238 = por %p236, %p237
      %p239 = scmp.ne.s32.totalorder %s230, %s231
      %p240 = scmp.eq.s32.totalorder %s26, 0
      %p241 = por %p239, %p240
      %p242 = scmp.ne.s32.totalorder %s230, %s231
      %p243 = scmp.eq.s32.totalorder %s27, 1
      %p244 = por %p242, %p243
      %p246 = scmp.ne.s32.totalorder %s231, %s245
      %p247 = scmp.eq.s32.totalorder %s27, 0
      %p248 = por %p246, %p247
      %p249 = scmp.le.s32.totalorder 1, %s21
      %p250 = scmp.lt.s32.totalorder %s21, 3
      %p251 = pnand %p249, %p250
      %p252 = pneg %p251
      // Predicated region
      $region9: #{tpu_custom_call.1} parent=5 // pred_check
        _
      $region10: #{tpu_custom_call.1} parent=5 // pred_check_branch
        %254 = sbr.rel (%p251) target = $region12
      $region11: #{tpu_custom_call.1} parent=5 // pred_region
        %s255 = ssub.s32 %s21, 1
        // Predicated region
        $region13: #{tpu_custom_call.1} parent=11 // pred_check
          %p256 = pneg %p94
        $region14: #{tpu_custom_call.1} parent=11 // pred_check_branch
          %258 = sbr.rel (%p256) target = $region16
        $region15: #{tpu_custom_call.1} parent=11 // pred_region
          _
        $region16: #{tpu_custom_call.1} parent=11 // pred_fallthru
          _
        // Predicated region
        $region17: #{tpu_custom_call.1} parent=11 // pred_check
          %p259 = pneg %p115
        $region18: #{tpu_custom_call.1} parent=11 // pred_check_branch
          %261 = sbr.rel (%p259) target = $region20
        $region19: #{tpu_custom_call.1} parent=11 // pred_region
          _
        $region20: #{tpu_custom_call.1} parent=11 // pred_fallthru
          _
        // Predicated region
        $region21: #{tpu_custom_call.1} parent=11 // pred_check
          %p262 = pneg %p136
        $region22: #{tpu_custom_call.1} parent=11 // pred_check_branch
          %264 = sbr.rel (%p262) target = $region24
        $region23: #{tpu_custom_call.1} parent=11 // pred_region
          _
        $region24: #{tpu_custom_call.1} parent=11 // pred_fallthru
          _
        // Predicated region
        $region25: #{tpu_custom_call.1} parent=11 // pred_check
          %p265 = pneg %p157
        $region26: #{tpu_custom_call.1} parent=11 // pred_check_branch
          %267 = sbr.rel (%p265) target = $region28
        $region27: #{tpu_custom_call.1} parent=11 // pred_region
          _
        $region28: #{tpu_custom_call.1} parent=11 // pred_fallthru
          _
        // Predicated region
        $region29: #{tpu_custom_call.1} parent=11 // pred_check
          %p268 = pneg %p178
        $region30: #{tpu_custom_call.1} parent=11 // pred_check_branch
          %270 = sbr.rel (%p268) target = $region32
        $region31: #{tpu_custom_call.1} parent=11 // pred_region
          _
        $region32: #{tpu_custom_call.1} parent=11 // pred_fallthru
          _
      $region12: #{tpu_custom_call.1} parent=5 // pred_fallthru
        _
      %p271 = scmp.lt.s32.totalorder %s21, 2
      // Predicated region
      $region33: #{tpu_custom_call.1} parent=5 // pred_check
        %p272 = pneg %p271
      $region34: #{tpu_custom_call.1} parent=5 // pred_check_branch
        %274 = sbr.rel (%p272) target = $region36
      $region35: #{tpu_custom_call.1} parent=5 // pred_region
        // Predicated region
        $region37: #{tpu_custom_call.1} parent=35 // pred_check
          %p275 = pneg %p41
        $region38: #{tpu_custom_call.1} parent=35 // pred_check_branch
          %277 = sbr.rel (%p275) target = $region40
        $region39: #{tpu_custom_call.1} parent=35 // pred_region
          %s278 = sand.u32 %s31, 1
          %s279 = sand.u32 %s31, 1
          %s280 = smul.addr %s279, 48
          %s281 = scalar_lea.vmem [#allocation3], %s280
          %s282 = smul.u32 4, %s21
          %s283 = smul.addr %s282, 4
          %s284 = scalar_lea.vmem %s0, %s283
          // Predicated region
          $region41: #{tpu_custom_call.1} parent=39 // pred_check
            _
          $region42: #{tpu_custom_call.1} parent=39 // pred_check_branch
            %286 = sbr.rel (0) target = $region44
          $region43: #{tpu_custom_call.1} parent=39 // pred_region
            // Predicated region
            $region45: #{tpu_custom_call.1} parent=43 // pred_check
              _
            $region46: #{tpu_custom_call.1} parent=43 // pred_check_branch
              %288 = sbr.rel (0) target = $region48
            $region47: #{tpu_custom_call.1} parent=43 // pred_region
              loop: start=0, step=1, limit=1
              $region49: #{tpu_custom_call.1} parent=47 // loop_pre_header
                _
              $region50: #{tpu_custom_call.1} parent=47 // loop_header
                %s290 = sphi 0, %s294
                %p291 = scmp.ge.s32.totalorder %s290, 1
                %s295 = sphi %s284, %s284
                %s296 = sphi %s281, %s281
              $region51: #{tpu_custom_call.1} parent=47 // loop_header_branch
                %293 = sbr.rel (%p291) target = $region55
              $region52: #{tpu_custom_call.1} parent=47 // loop_body
                %v297 = vld [vmem:[%s295] sm:$0xff]
                %298 = vst [vmem:[%s296] sm:$0xff] %v297
                %v299 = vld [vmem:[%s295 + $0x8] sm:$0xff]
                %300 = vst [vmem:[%s296 + $0x8] sm:$0xff] %v299
                %v301 = vld [vmem:[%s295 + $0x20] sm:$0xff]
                %302 = vst [vmem:[%s296 + $0x10] sm:$0xff] %v301
                %v303 = vld [vmem:[%s295 + $0x28] sm:$0xff]
                %304 = vst [vmem:[%s296 + $0x18] sm:$0xff] %v303
                %v305 = vld [vmem:[%s295 + $0x40] sm:$0xff]
                %306 = vst [vmem:[%s296 + $0x20] sm:$0xff] %v305
                %v307 = vld [vmem:[%s295 + $0x48] sm:$0xff]
                %308 = vst [vmem:[%s296 + $0x28] sm:$0xff] %v307
              $region53: #{tpu_custom_call.1} parent=47 // loop_footer
                %s294 = sadd.s32 1, %s290
              $region54: #{tpu_custom_call.1} parent=47 // loop_footer_branch
                %289 = sbr.rel target = $region50
              $region55: #{tpu_custom_call.1} parent=47 // loop_exit
                _
            $region48: #{tpu_custom_call.1} parent=43 // pred_fallthru
              _
            // Predicated region
            $region56: #{tpu_custom_call.1} parent=43 // pred_check
              _
            $region57: #{tpu_custom_call.1} parent=43 // pred_check_branch
              %310 = sbr.rel target = $region59
            $region58: #{tpu_custom_call.1} parent=43 // pred_region
              _
            $region59: #{tpu_custom_call.1} parent=43 // pred_fallthru
              _
          $region44: #{tpu_custom_call.1} parent=39 // pred_fallthru
            _
          %311 = vnop
        $region40: #{tpu_custom_call.1} parent=35 // pred_fallthru
          _
        // Predicated region
        $region60: #{tpu_custom_call.1} parent=35 // pred_check
          %p312 = pneg %p67
        $region61: #{tpu_custom_call.1} parent=35 // pred_check_branch
          %314 = sbr.rel (%p312) target = $region63
        $region62: #{tpu_custom_call.1} parent=35 // pred_region
          %s315 = sand.u32 %s57, 1
          %s316 = scalar_lea.sflag [#allocation5], %s315
          %s317 = sand.u32 %s57, 1
          %s318 = smul.addr %s317, 256
          %s319 = scalar_lea.vmem [#allocation4], %s318
          %s320 = smul.u32 64, %s21
          %s322 = ssub.s32 4096, 4096
          %323 = vsyncadd %s316, %s322
          %s324 = smul.addr %s320, 64
          %s325 = scalar_lea.hbm %s1, %s324
          %s326 = sshll.u32 %s319, 4
          %s327 = int_to_ptr.vmem [resolvable:$true] %s326
          %332 = dma.hbm_to_vmem [thread:$0]  %s325, 4096, %s327, %s316, 64, 64, 4
        $region63: #{tpu_custom_call.1} parent=35 // pred_fallthru
          _
      $region36: #{tpu_custom_call.1} parent=5 // pred_fallthru
        _
      %p333 = scmp.le.s32.totalorder 1, %s21
      %p334 = scmp.lt.s32.totalorder %s21, 3
      %p335 = pnand %p333, %p334
      %p336 = pneg %p335
      // Predicated region
      $region64: #{tpu_custom_call.1} parent=5 // pred_check
        _
      $region65: #{tpu_custom_call.1} parent=5 // pred_check_branch
        %338 = sbr.rel (%p335) target = $region67
      $region66: #{tpu_custom_call.1} parent=5 // pred_region
        %s339 = ssub.s32 %s21, 1
        %s340 = sand.u32 %s34, 1
        %s341 = sand.u32 %s34, 1
        %s342 = smul.addr %s341, 48
        %s343 = scalar_lea.vmem [#allocation3], %s342
        // Predicated region
        $region68: #{tpu_custom_call.1} parent=66 // pred_check
          %p344 = pneg %p47
        $region69: #{tpu_custom_call.1} parent=66 // pred_check_branch
          %346 = sbr.rel (%p344) target = $region71
        $region70: #{tpu_custom_call.1} parent=66 // pred_region
          _
        $region71: #{tpu_custom_call.1} parent=66 // pred_fallthru
          _
        %s347 = sand.u32 %s60, 1
        %s348 = scalar_lea.sflag [#allocation5], %s347
        %s349 = sand.u32 %s60, 1
        %s350 = smul.addr %s349, 256
        %s351 = scalar_lea.vmem [#allocation4], %s350
        // Predicated region
        $region72: #{tpu_custom_call.1} parent=66 // pred_check
          %p352 = pneg %p73
        $region73: #{tpu_custom_call.1} parent=66 // pred_check_branch
          %354 = sbr.rel (%p352) target = $region75
        $region74: #{tpu_custom_call.1} parent=66 // pred_region
          %355 = dma.done %s348, 4096
        $region75: #{tpu_custom_call.1} parent=66 // pred_fallthru
          _
        %s356 = sand.u32 %s34, 1
        %s357 = sand.u32 %s34, 1
        %s358 = smul.addr %s357, 48
        %s359 = scalar_lea.vmem [#allocation3], %s358
        %p360 = pneg %p47
        %p361 = pneg %p44
        %s362 = sand.u32 %s60, 1
        %s363 = scalar_lea.sflag [#allocation5], %s362
        %s364 = sand.u32 %s60, 1
        %s365 = smul.addr %s364, 256
        %s366 = scalar_lea.vmem [#allocation4], %s365
        %p367 = pneg %p73
        %p368 = pneg %p70
        %p369 = pneg %p94
        %p370 = pneg %p91
        %p371 = pneg %p115
        %p372 = pneg %p112
        %p373 = pneg %p136
        %p374 = pneg %p133
        %p375 = pneg %p157
        %p376 = pneg %p154
        %p377 = pneg %p178
        %p378 = pneg %p175
        %p379 = pneg %p199
        %p380 = pneg %p196
        %p381 = pneg %p220
        %p382 = pneg %p217
        %p383 = pneg %p241
        %p384 = pneg %p238
        %s385 = smul.u32 4, %s26
        %s386 = smul.u32 64, %s26
        %p388 = scmp.eq.s32.totalorder %s26, 0
        // Predicated region
        $region76: #{tpu_custom_call.1} parent=66 // pred_check
          %p389 = pneg %p388
        $region77: #{tpu_custom_call.1} parent=66 // pred_check_branch
          %391 = sbr.rel (%p389) target = $region79
        $region78: #{tpu_custom_call.1} parent=66 // pred_region
          %392 = vst [vmem:[#allocation2] sm:$0xff] 0.0
          %393 = vst [vmem:[#allocation2 + $0x8] sm:$0xff] 0.0
          %394 = vst [vmem:[#allocation2 + $0x10] sm:$0xff] 0.0
        $region79: #{tpu_custom_call.1} parent=66 // pred_fallthru
          _
        %v395 = vld [vmem:[#allocation2] sm:$0xff]
        %v396 = vld [vmem:[#allocation2 + $0x8] sm:$0xff]
        %v397 = vld [vmem:[#allocation2 + $0x10] sm:$0xff]
        %v398 = vld [vmem:[%s343] sm:$0xff]
        %v399 = vld [vmem:[%s343 + $0x8] sm:$0xff]
        %v400 = vld [vmem:[%s343 + $0x10] sm:$0xff]
        %v401 = vld [vmem:[%s343 + $0x18] sm:$0xff]
        %v402 = vld [vmem:[%s343 + $0x20] sm:$0xff]
        %v403 = vld [vmem:[%s343 + $0x28] sm:$0xff]
        %v404 = vld [vmem:[%s351] sm:$0xf]
        %v405 = vld [vmem:[%s351 + $0x4] sm:$0xf]
        %v406 = vld [vmem:[%s351 + $0x8] sm:$0xf]
        %v407 = vld [vmem:[%s351 + $0xc] sm:$0xf]
        %v408 = vld [vmem:[%s351 + $0x10] sm:$0xf]
        %v409 = vld [vmem:[%s351 + $0x14] sm:$0xf]
        %v410 = vld [vmem:[%s351 + $0x18] sm:$0xf]
        %v411 = vld [vmem:[%s351 + $0x1c] sm:$0xf]
        %v412 = vld [vmem:[%s351 + $0x20] sm:$0xf]
        %v413 = vld [vmem:[%s351 + $0x24] sm:$0xf]
        %v414 = vld [vmem:[%s351 + $0x28] sm:$0xf]
        %v415 = vld [vmem:[%s351 + $0x2c] sm:$0xf]
        %v416 = vld [vmem:[%s351 + $0x30] sm:$0xf]
        %v417 = vld [vmem:[%s351 + $0x34] sm:$0xf]
        %v418 = vld [vmem:[%s351 + $0x38] sm:$0xf]
        %v419 = vld [vmem:[%s351 + $0x3c] sm:$0xf]
        %v420 = vld [vmem:[%s351 + $0x40] sm:$0xf]
        %v421 = vld [vmem:[%s351 + $0x44] sm:$0xf]
        %v422 = vld [vmem:[%s351 + $0x48] sm:$0xf]
        %v423 = vld [vmem:[%s351 + $0x4c] sm:$0xf]
        %v424 = vld [vmem:[%s351 + $0x50] sm:$0xf]
        %v425 = vld [vmem:[%s351 + $0x54] sm:$0xf]
        %v426 = vld [vmem:[%s351 + $0x58] sm:$0xf]
        %v427 = vld [vmem:[%s351 + $0x5c] sm:$0xf]
        %v428 = vld [vmem:[%s351 + $0x60] sm:$0xf]
        %v429 = vld [vmem:[%s351 + $0x64] sm:$0xf]
        %v430 = vld [vmem:[%s351 + $0x68] sm:$0xf]
        %v431 = vld [vmem:[%s351 + $0x6c] sm:$0xf]
        %v432 = vld [vmem:[%s351 + $0x70] sm:$0xf]
        %v433 = vld [vmem:[%s351 + $0x74] sm:$0xf]
        %v434 = vld [vmem:[%s351 + $0x78] sm:$0xf]
        %v435 = vld [vmem:[%s351 + $0x7c] sm:$0xf]
        %v436 = vld [vmem:[%s351 + $0x80] sm:$0xf]
        %v437 = vld [vmem:[%s351 + $0x84] sm:$0xf]
        %v438 = vld [vmem:[%s351 + $0x88] sm:$0xf]
        %v439 = vld [vmem:[%s351 + $0x8c] sm:$0xf]
        %v440 = vld [vmem:[%s351 + $0x90] sm:$0xf]
        %v441 = vld [vmem:[%s351 + $0x94] sm:$0xf]
        %v442 = vld [vmem:[%s351 + $0x98] sm:$0xf]
        %v443 = vld [vmem:[%s351 + $0x9c] sm:$0xf]
        %v444 = vld [vmem:[%s351 + $0xa0] sm:$0xf]
        %v445 = vld [vmem:[%s351 + $0xa4] sm:$0xf]
        %v446 = vld [vmem:[%s351 + $0xa8] sm:$0xf]
        %v447 = vld [vmem:[%s351 + $0xac] sm:$0xf]
        %v448 = vld [vmem:[%s351 + $0xb0] sm:$0xf]
        %v449 = vld [vmem:[%s351 + $0xb4] sm:$0xf]
        %v450 = vld [vmem:[%s351 + $0xb8] sm:$0xf]
        %v451 = vld [vmem:[%s351 + $0xbc] sm:$0xf]
        %v452 = vld [vmem:[%s351 + $0xc0] sm:$0xf]
        %v453 = vld [vmem:[%s351 + $0xc4] sm:$0xf]
        %v454 = vld [vmem:[%s351 + $0xc8] sm:$0xf]
        %v455 = vld [vmem:[%s351 + $0xcc] sm:$0xf]
        %v456 = vld [vmem:[%s351 + $0xd0] sm:$0xf]
        %v457 = vld [vmem:[%s351 + $0xd4] sm:$0xf]
        %v458 = vld [vmem:[%s351 + $0xd8] sm:$0xf]
        %v459 = vld [vmem:[%s351 + $0xdc] sm:$0xf]
        %v460 = vld [vmem:[%s351 + $0xe0] sm:$0xf]
        %v461 = vld [vmem:[%s351 + $0xe4] sm:$0xf]
        %v462 = vld [vmem:[%s351 + $0xe8] sm:$0xf]
        %v463 = vld [vmem:[%s351 + $0xec] sm:$0xf]
        %v464 = vld [vmem:[%s351 + $0xf0] sm:$0xf]
        %v465 = vld [vmem:[%s351 + $0xf4] sm:$0xf]
        %v466 = vld [vmem:[%s351 + $0xf8] sm:$0xf]
        %v467 = vld [vmem:[%s351 + $0xfc] sm:$0xf]
        %v474 = vunpack.c.l.b16 %v398
        %v475 = vunpack.c.h.b16 %v398
        %v476 = vunpack.c.l.b16 %v399
        %v477 = vunpack.c.h.b16 %v399
        %v478 = vunpack.c.l.b16 %v400
        %v479 = vunpack.c.h.b16 %v400
        %v480 = vunpack.c.l.b16 %v401
        %v481 = vunpack.c.h.b16 %v401
        %v482 = vunpack.c.l.b16 %v402
        %v483 = vunpack.c.h.b16 %v402
        %v484 = vunpack.c.l.b16 %v403
        %v485 = vunpack.c.h.b16 %v403
        %v486 = vpack.c.b16 %v478, %v474
        %v487 = vpack.c.b16 %v479, %v475
        %v488 = vpack.c.b16 %v480, %v476
        %v489 = vpack.c.b16 %v481, %v477
        %v490 = vpack.c.b16 %v482, %v482
        %v491 = vpack.c.b16 %v483, %v483
        %v492 = vpack.c.b16 %v484, %v484
        %v493 = vpack.c.b16 %v485, %v485
        %v566 = vunpack.c.l.b16 %v404
        %v567 = vunpack.c.l.b16 %v405
        %v568 = vunpack.c.l.b16 %v406
        %v569 = vunpack.c.l.b16 %v407
        %v570 = vunpack.c.l.b16 %v408
        %v571 = vunpack.c.l.b16 %v409
        %v572 = vunpack.c.l.b16 %v410
        %v573 = vunpack.c.l.b16 %v411
        %v574 = vunpack.c.l.b16 %v412
        %v575 = vunpack.c.l.b16 %v413
        %v576 = vunpack.c.l.b16 %v414
        %v577 = vunpack.c.l.b16 %v415
        %v578 = vunpack.c.l.b16 %v416
        %v579 = vunpack.c.l.b16 %v417
        %v580 = vunpack.c.l.b16 %v418
        %v581 = vunpack.c.l.b16 %v419
        %v582 = vunpack.c.l.b16 %v420
        %v583 = vunpack.c.l.b16 %v421
        %v584 = vunpack.c.l.b16 %v422
        %v585 = vunpack.c.l.b16 %v423
        %v586 = vunpack.c.l.b16 %v424
        %v587 = vunpack.c.l.b16 %v425
        %v588 = vunpack.c.l.b16 %v426
        %v589 = vunpack.c.l.b16 %v427
        %v590 = vunpack.c.l.b16 %v428
        %v591 = vunpack.c.l.b16 %v429
        %v592 = vunpack.c.l.b16 %v430
        %v593 = vunpack.c.l.b16 %v431
        %v594 = vunpack.c.l.b16 %v432
        %v595 = vunpack.c.l.b16 %v433
        %v596 = vunpack.c.l.b16 %v434
        %v597 = vunpack.c.l.b16 %v435
        %v598 = vunpack.c.l.b16 %v436
        %v599 = vunpack.c.l.b16 %v437
        %v600 = vunpack.c.l.b16 %v438
        %v601 = vunpack.c.l.b16 %v439
        %v602 = vunpack.c.l.b16 %v440
        %v603 = vunpack.c.l.b16 %v441
        %v604 = vunpack.c.l.b16 %v442
        %v605 = vunpack.c.l.b16 %v443
        %v606 = vunpack.c.l.b16 %v444
        %v607 = vunpack.c.l.b16 %v445
        %v608 = vunpack.c.l.b16 %v446
        %v609 = vunpack.c.l.b16 %v447
        %v610 = vunpack.c.l.b16 %v448
        %v611 = vunpack.c.l.b16 %v449
        %v612 = vunpack.c.l.b16 %v450
        %v613 = vunpack.c.l.b16 %v451
        %v614 = vunpack.c.l.b16 %v452
        %v615 = vunpack.c.l.b16 %v453
        %v616 = vunpack.c.l.b16 %v454
        %v617 = vunpack.c.l.b16 %v455
        %v618 = vunpack.c.l.b16 %v456
        %v619 = vunpack.c.l.b16 %v457
        %v620 = vunpack.c.l.b16 %v458
        %v621 = vunpack.c.l.b16 %v459
        %v622 = vunpack.c.l.b16 %v460
        %v623 = vunpack.c.l.b16 %v461
        %v624 = vunpack.c.l.b16 %v462
        %v625 = vunpack.c.l.b16 %v463
        %v626 = vunpack.c.l.b16 %v464
        %v627 = vunpack.c.l.b16 %v465
        %v628 = vunpack.c.l.b16 %v466
        %v629 = vunpack.c.l.b16 %v467
        %v630 = vpack.c.b16 %v567, %v566
        %v631 = vpack.c.b16 %v569, %v568
        %v632 = vpack.c.b16 %v571, %v570
        %v633 = vpack.c.b16 %v573, %v572
        %v634 = vpack.c.b16 %v575, %v574
        %v635 = vpack.c.b16 %v577, %v576
        %v636 = vpack.c.b16 %v579, %v578
        %v637 = vpack.c.b16 %v581, %v580
        %v638 = vpack.c.b16 %v583, %v582
        %v639 = vpack.c.b16 %v585, %v584
        %v640 = vpack.c.b16 %v587, %v586
        %v641 = vpack.c.b16 %v589, %v588
        %v642 = vpack.c.b16 %v591, %v590
        %v643 = vpack.c.b16 %v593, %v592
        %v644 = vpack.c.b16 %v595, %v594
        %v645 = vpack.c.b16 %v597, %v596
        %v646 = vpack.c.b16 %v599, %v598
        %v647 = vpack.c.b16 %v601, %v600
        %v648 = vpack.c.b16 %v603, %v602
        %v649 = vpack.c.b16 %v605, %v604
        %v650 = vpack.c.b16 %v607, %v606
        %v651 = vpack.c.b16 %v609, %v608
        %v652 = vpack.c.b16 %v611, %v610
        %v653 = vpack.c.b16 %v613, %v612
        %v654 = vpack.c.b16 %v615, %v614
        %v655 = vpack.c.b16 %v617, %v616
        %v656 = vpack.c.b16 %v619, %v618
        %v657 = vpack.c.b16 %v621, %v620
        %v658 = vpack.c.b16 %v623, %v622
        %v659 = vpack.c.b16 %v625, %v624
        %v660 = vpack.c.b16 %v627, %v626
        %v661 = vpack.c.b16 %v629, %v628
        %694 = vmatprep.subr.bf16.mxu0 0
        %695 = vmatpush1.bf16.msra.mxu0 %v630
        %696 = vmatprep.subr.bf16.mxu0 0
        %697 = vmatpush1.bf16.msra.mxu0 %v631
        %698 = vmatprep.subr.bf16.mxu0 0
        %699 = vmatpush1.bf16.msra.mxu0 %v632
        %700 = vmatprep.subr.bf16.mxu0 0
        %701 = vmatpush1.bf16.msra.mxu0 %v633
        %702 = vmatprep.subr.bf16.mxu0 0
        %703 = vmatpush1.bf16.msra.mxu0 %v634
        %704 = vmatprep.subr.bf16.mxu0 0
        %705 = vmatpush1.bf16.msra.mxu0 %v635
        %706 = vmatprep.subr.bf16.mxu0 0
        %707 = vmatpush1.bf16.msra.mxu0 %v636
        %708 = vmatprep.subr.bf16.mxu0 0
        %709 = vmatpush1.bf16.msra.mxu0 %v637
        %710 = vmatprep.subr.bf16.mxu0 0
        %711 = vmatpush1.bf16.msra.mxu0 %v638
        %712 = vmatprep.subr.bf16.mxu0 0
        %713 = vmatpush1.bf16.msra.mxu0 %v639
        %714 = vmatprep.subr.bf16.mxu0 0
        %715 = vmatpush1.bf16.msra.mxu0 %v640
        %716 = vmatprep.subr.bf16.mxu0 0
        %717 = vmatpush1.bf16.msra.mxu0 %v641
        %718 = vmatprep.subr.bf16.mxu0 0
        %719 = vmatpush1.bf16.msra.mxu0 %v642
        %720 = vmatprep.subr.bf16.mxu0 0
        %721 = vmatpush1.bf16.msra.mxu0 %v643
        %722 = vmatprep.subr.bf16.mxu0 0
        %723 = vmatpush1.bf16.msra.mxu0 %v644
        %724 = vmatprep.subr.bf16.mxu0 0
        %725 = vmatpush1.bf16.msra.mxu0 %v645
        %726 = vmatprep.mubr.bf16.mxu0 %v487
        %727 = vmatmul.mubr.bf16.gmra.mrb[0].mxu0 %v486
        %v728 = vpop.f32.mrb[0].mxu0
        %v729 = vadd.f32 0.0, %v728
        %v730 = vpop.f32.mrb[0].mxu0
        %v731 = vpop.f32.mrb[0].mxu0
        %v732 = vadd.f32 0.0, %v731
        %v733 = vpop.f32.mrb[0].mxu0
        %734 = vmatprep.mubr.bf16.mxu0 %v491
        %735 = vmatmul.mubr.bf16.gmra.mrb[0].mxu0 %v490
        %v736 = vpop.f32.mrb[0].mxu0
        %v737 = vadd.f32 0.0, %v736
        %v738 = vpop.f32.mrb[0].mxu0
        %v739 = vpop.f32.mrb[0].mxu0
        %v740 = vpop.f32.mrb[0].mxu0
        %741 = vdwg.mxu0
        %742 = vmatprep.subr.bf16.mxu0 0
        %743 = vmatpush1.bf16.msra.mxu0 %v646
        %744 = vmatprep.subr.bf16.mxu0 0
        %745 = vmatpush1.bf16.msra.mxu0 %v647
        %746 = vmatprep.subr.bf16.mxu0 0
        %747 = vmatpush1.bf16.msra.mxu0 %v648
        %748 = vmatprep.subr.bf16.mxu0 0
        %749 = vmatpush1.bf16.msra.mxu0 %v649
        %750 = vmatprep.subr.bf16.mxu0 0
        %751 = vmatpush1.bf16.msra.mxu0 %v650
        %752 = vmatprep.subr.bf16.mxu0 0
        %753 = vmatpush1.bf16.msra.mxu0 %v651
        %754 = vmatprep.subr.bf16.mxu0 0
        %755 = vmatpush1.bf16.msra.mxu0 %v652
        %756 = vmatprep.subr.bf16.mxu0 0
        %757 = vmatpush1.bf16.msra.mxu0 %v653
        %758 = vmatprep.subr.bf16.mxu0 0
        %759 = vmatpush1.bf16.msra.mxu0 %v654
        %760 = vmatprep.subr.bf16.mxu0 0
        %761 = vmatpush1.bf16.msra.mxu0 %v655
        %762 = vmatprep.subr.bf16.mxu0 0
        %763 = vmatpush1.bf16.msra.mxu0 %v656
        %764 = vmatprep.subr.bf16.mxu0 0
        %765 = vmatpush1.bf16.msra.mxu0 %v657
        %766 = vmatprep.subr.bf16.mxu0 0
        %767 = vmatpush1.bf16.msra.mxu0 %v658
        %768 = vmatprep.subr.bf16.mxu0 0
        %769 = vmatpush1.bf16.msra.mxu0 %v659
        %770 = vmatprep.subr.bf16.mxu0 0
        %771 = vmatpush1.bf16.msra.mxu0 %v660
        %772 = vmatprep.subr.bf16.mxu0 0
        %773 = vmatpush1.bf16.msra.mxu0 %v661
        %774 = vmatprep.mubr.bf16.mxu0 %v489
        %775 = vmatmul.mubr.bf16.gmra.mrb[0].mxu0 %v488
        %v776 = vpop.f32.mrb[0].mxu0
        %v777 = vadd.f32 %v729, %v776
        %v778 = vpop.f32.mrb[0].mxu0
        %v779 = vpop.f32.mrb[0].mxu0
        %v780 = vadd.f32 %v732, %v779
        %v781 = vpop.f32.mrb[0].mxu0
        %782 = vmatprep.mubr.bf16.mxu0 %v493
        %783 = vmatmul.mubr.bf16.gmra.mrb[0].mxu0 %v492
        %v784 = vpop.f32.mrb[0].mxu0
        %v785 = vadd.f32 %v737, %v784
        %v786 = vpop.f32.mrb[0].mxu0
        %v787 = vpop.f32.mrb[0].mxu0
        %v788 = vpop.f32.mrb[0].mxu0
        %789 = vdwg.mxu0
        %v790 = vadd.f32 %v395, %v777
        %v791 = vadd.f32 %v396, %v780
        %v792 = vadd.f32 %v397, %v785
        %793 = vst [vmem:[#allocation2] sm:$0xff] %v790
        %794 = vst [vmem:[#allocation2 + $0x8] sm:$0xff] %v791
        %795 = vst [vmem:[#allocation2 + $0x10] sm:$0xff] %v792
        %p796 = scmp.eq.s32.totalorder %s26, 1
        // Predicated region
        $region80: #{tpu_custom_call.1} parent=66 // pred_check
          %p797 = pneg %p796
        $region81: #{tpu_custom_call.1} parent=66 // pred_check_branch
          %799 = sbr.rel (%p797) target = $region83
        $region82: #{tpu_custom_call.1} parent=66 // pred_region
          %v800 = vld [vmem:[#allocation2] sm:$0xff]
          %v801 = vld [vmem:[#allocation2 + $0x8] sm:$0xff]
          %v802 = vld [vmem:[#allocation2 + $0x10] sm:$0xff]
          %v803 = vld [vmem:[%s2] sm:$0x1]
          %v805 = vlaneseq
          %v806 = vshrl.u32 %v805, 7
          %v807 = vsub.s32 0, %v806
          %v808 = vrot.slane %v803, %v807
          %v810 = vadd.f32 %v800, %v808
          %v811 = vadd.f32 %v801, %v808
          %v812 = vadd.f32 %v802, %v808
          %v813 = vmax.f32 %v810, 0.0
          %v814 = vmax.f32 %v811, 0.0
          %v815 = vmax.f32 %v812, 0.0
          %v816 = vpack.c.bf16 %v814, %v813
          %v817 = vpack.c.bf16 %v815, %v815
          %v818 = vld [vmem:[%s3] sm:$0xf]
          %v819 = vld [vmem:[%s3 + $0x4] sm:$0xf]
          %v820 = vld [vmem:[%s3 + $0x8] sm:$0xf]
          %v821 = vld [vmem:[%s3 + $0xc] sm:$0xf]
          %v822 = vld [vmem:[%s3 + $0x10] sm:$0xf]
          %v823 = vld [vmem:[%s3 + $0x14] sm:$0xf]
          %v824 = vld [vmem:[%s3 + $0x18] sm:$0xf]
          %v825 = vld [vmem:[%s3 + $0x1c] sm:$0xf]
          %v826 = vld [vmem:[%s3 + $0x20] sm:$0xf]
          %v827 = vld [vmem:[%s3 + $0x24] sm:$0xf]
          %v828 = vld [vmem:[%s3 + $0x28] sm:$0xf]
          %v829 = vld [vmem:[%s3 + $0x2c] sm:$0xf]
          %v830 = vld [vmem:[%s3 + $0x30] sm:$0xf]
          %v831 = vld [vmem:[%s3 + $0x34] sm:$0xf]
          %v832 = vld [vmem:[%s3 + $0x38] sm:$0xf]
          %v833 = vld [vmem:[%s3 + $0x3c] sm:$0xf]
          %v834 = vld [vmem:[%s4] sm:$0x1]
          %v836 = vlaneseq
          %v837 = vshrl.u32 %v836, 7
          %v838 = vsub.s32 0, %v837
          %v839 = vrot.slane %v834, %v838
          %v857 = vunpack.c.l.b16 %v818
          %v858 = vunpack.c.l.b16 %v819
          %v859 = vunpack.c.l.b16 %v820
          %v860 = vunpack.c.l.b16 %v821
          %v861 = vunpack.c.l.b16 %v822
          %v862 = vunpack.c.l.b16 %v823
          %v863 = vunpack.c.l.b16 %v824
          %v864 = vunpack.c.l.b16 %v825
          %v865 = vunpack.c.l.b16 %v826
          %v866 = vunpack.c.l.b16 %v827
          %v867 = vunpack.c.l.b16 %v828
          %v868 = vunpack.c.l.b16 %v829
          %v869 = vunpack.c.l.b16 %v830
          %v870 = vunpack.c.l.b16 %v831
          %v871 = vunpack.c.l.b16 %v832
          %v872 = vunpack.c.l.b16 %v833
          %v873 = vpack.c.b16 %v858, %v857
          %v874 = vpack.c.b16 %v860, %v859
          %v875 = vpack.c.b16 %v862, %v861
          %v876 = vpack.c.b16 %v864, %v863
          %v877 = vpack.c.b16 %v866, %v865
          %v878 = vpack.c.b16 %v868, %v867
          %v879 = vpack.c.b16 %v870, %v869
          %v880 = vpack.c.b16 %v872, %v871
          %889 = vmatprep.subr.bf16.mxu0 0
          %890 = vmatpush1.bf16.msra.mxu0 %v873
          %891 = vmatprep.subr.bf16.mxu0 0
          %892 = vmatpush1.bf16.msra.mxu0 %v874
          %893 = vmatprep.subr.bf16.mxu0 0
          %894 = vmatpush1.bf16.msra.mxu0 %v875
          %895 = vmatprep.subr.bf16.mxu0 0
          %896 = vmatpush1.bf16.msra.mxu0 %v876
          %897 = vmatprep.subr.bf16.mxu0 0
          %898 = vmatpush1.bf16.msra.mxu0 %v877
          %899 = vmatprep.subr.bf16.mxu0 0
          %900 = vmatpush1.bf16.msra.mxu0 %v878
          %901 = vmatprep.subr.bf16.mxu0 0
          %902 = vmatpush1.bf16.msra.mxu0 %v879
          %903 = vmatprep.subr.bf16.mxu0 0
          %904 = vmatpush1.bf16.msra.mxu0 %v880
          %905 = vmatprep.subr.bf16.mxu0 0
          %906 = vmatpush1.bf16.msra.mxu0 0
          %907 = vmatprep.subr.bf16.mxu0 0
          %908 = vmatpush1.bf16.msra.mxu0 0
          %909 = vmatprep.subr.bf16.mxu0 0
          %910 = vmatpush1.bf16.msra.mxu0 0
          %911 = vmatprep.subr.bf16.mxu0 0
          %912 = vmatpush1.bf16.msra.mxu0 0
          %913 = vmatprep.subr.bf16.mxu0 0
          %914 = vmatpush1.bf16.msra.mxu0 0
          %915 = vmatprep.subr.bf16.mxu0 0
          %916 = vmatpush1.bf16.msra.mxu0 0
          %917 = vmatprep.subr.bf16.mxu0 0
          %918 = vmatpush1.bf16.msra.mxu0 0
          %919 = vmatprep.subr.bf16.mxu0 0
          %920 = vmatpush1.bf16.msra.mxu0 0
          %921 = vmatprep.mubr.bf16.mxu0 0
          %922 = vmatmul.mubr.bf16.gmra.mrb[0].mxu0 %v816
          %v923 = vpop.f32.mrb[0].mxu0
          %v924 = vadd.f32 %v839, %v923
          %v925 = vpop.f32.mrb[0].mxu0
          %v926 = vpop.f32.mrb[0].mxu0
          %v927 = vadd.f32 %v839, %v926
          %v928 = vpop.f32.mrb[0].mxu0
          %929 = vmatprep.mubr.bf16.mxu0 0
          %930 = vmatmul.mubr.bf16.gmra.mrb[0].mxu0 %v817
          %v931 = vpop.f32.mrb[0].mxu0
          %v932 = vadd.f32 %v839, %v931
          %v933 = vpop.f32.mrb[0].mxu0
          %v934 = vpop.f32.mrb[0].mxu0
          %v935 = vpop.f32.mrb[0].mxu0
          %936 = vdwg.mxu0
          %937 = vst [vmem:[#allocation7] sm:$0xff] %v927
          %938 = vst [vmem:[#allocation7 + $0x8] sm:$0xff] %v932
          %v939 = vld [vmem:[%s5] sm:$0xff]
          %v940 = vld [vmem:[%s5 + $0x8] sm:$0xff]
          %v941 = vld [vmem:[%s5 + $0x10] sm:$0xff]
          %v942 = vld [vmem:[%s5 + $0x18] sm:$0xff]
          %v943 = vld [vmem:[%s5 + $0x20] sm:$0xff]
          %v944 = vld [vmem:[%s5 + $0x28] sm:$0xff]
          %v945 = vld [vmem:[%s5 + $0x30] sm:$0xff]
          %v946 = vld [vmem:[%s5 + $0x38] sm:$0xff]
          %v947 = vld [vmem:[%s5 + $0x40] sm:$0xff]
          %v948 = vld [vmem:[%s5 + $0x48] sm:$0xff]
          %v949 = vld [vmem:[%s5 + $0x50] sm:$0xff]
          %v950 = vld [vmem:[%s5 + $0x58] sm:$0xff]
          %v951 = vld [vmem:[%s5 + $0x60] sm:$0xff]
          %v952 = vld [vmem:[%s5 + $0x68] sm:$0xff]
          %v953 = vld [vmem:[%s5 + $0x70] sm:$0xff]
          %v954 = vld [vmem:[%s5 + $0x78] sm:$0xff]
          %vm955 = vcmask 64512
          %v957 = vsel %vm955, %v939, 0
          %v960 = vsel %vm955, %v940, 0
          %v963 = vsel %vm955, %v941, 0
          %v966 = vsel %vm955, %v942, 0
          %v969 = vsel %vm955, %v943, 0
          %v972 = vsel %vm955, %v944, 0
          %v975 = vsel %vm955, %v945, 0
          %v978 = vsel %vm955, %v946, 0
          %v981 = vsel %vm955, %v947, 0
          %v984 = vsel %vm955, %v948, 0
          %v987 = vsel %vm955, %v949, 0
          %v990 = vsel %vm955, %v950, 0
          %v993 = vsel %vm955, %v951, 0
          %v996 = vsel %vm955, %v952, 0
          %v999 = vsel %vm955, %v953, 0
          %v1002 = vsel %vm955, %v954, 0
          %1004 = vmatprep.subr.mxu0 0.0
          %1005 = vmatpush1.msra.mxu0 %v924
          %1006 = vmatprep.subr.mxu0 0.0
          %1007 = vmatpush1.msra.mxu0 0.0
          %1008 = vmatprep.subr.mxu0 0.0
          %1009 = vmatpush1.msra.mxu0 0.0
          %1010 = vmatprep.subr.mxu0 0.0
          %1011 = vmatpush1.msra.mxu0 0.0
          %1012 = vmatprep.subr.mxu0 0.0
          %1013 = vmatpush1.msra.mxu0 0.0
          %1014 = vmatprep.subr.mxu0 0.0
          %1015 = vmatpush1.msra.mxu0 0.0
          %1016 = vmatprep.subr.mxu0 0.0
          %1017 = vmatpush1.msra.mxu0 0.0
          %1018 = vmatprep.subr.mxu0 0.0
          %1019 = vmatpush1.msra.mxu0 0.0
          %1020 = vmatprep.subr.mxu0 0.0
          %1021 = vmatpush1.msra.mxu0 0.0
          %1022 = vmatprep.subr.mxu0 0.0
          %1023 = vmatpush1.msra.mxu0 0.0
          %1024 = vmatprep.subr.mxu0 0.0
          %1025 = vmatpush1.msra.mxu0 0.0
          %1026 = vmatprep.subr.mxu0 0.0
          %1027 = vmatpush1.msra.mxu0 0.0
          %1028 = vmatprep.subr.mxu0 0.0
          %1029 = vmatpush1.msra.mxu0 0.0
          %1030 = vmatprep.subr.mxu0 0.0
          %1031 = vmatpush1.msra.mxu0 0.0
          %1032 = vmatprep.subr.mxu0 0.0
          %1033 = vmatpush1.msra.mxu0 0.0
          %1034 = vmatprep.subr.mxu0 0.0
          %1035 = vmatpush1.msra.mxu0 0.0
          %1036 = vmatprep.subr.mxu0 0.0
          %1037 = vmatpush1.msra.mxu0 0.0
          %1038 = vmatprep.subr.mxu0 0.0
          %1039 = vmatpush1.msra.mxu0 0.0
          %1040 = vmatprep.subr.mxu0 0.0
          %1041 = vmatpush1.msra.mxu0 0.0
          %1042 = vmatprep.subr.mxu0 0.0
          %1043 = vmatpush1.msra.mxu0 0.0
          %1044 = vmatprep.subr.mxu0 0.0
          %1045 = vmatpush1.msra.mxu0 0.0
          %1046 = vmatprep.subr.mxu0 0.0
          %1047 = vmatpush1.msra.mxu0 0.0
          %1048 = vmatprep.subr.mxu0 0.0
          %1049 = vmatpush1.msra.mxu0 0.0
          %1050 = vmatprep.subr.mxu0 0.0
          %1051 = vmatpush1.msra.mxu0 0.0
          %1052 = vmatprep.subr.mxu0 0.0
          %1053 = vmatpush1.msra.mxu0 0.0
          %1054 = vmatprep.subr.mxu0 0.0
          %1055 = vmatpush1.msra.mxu0 0.0
          %1056 = vmatprep.subr.mxu0 0.0
          %1057 = vmatpush1.msra.mxu0 0.0
          %1058 = vmatprep.subr.mxu0 0.0
          %1059 = vmatpush1.msra.mxu0 0.0
          %1060 = vmatprep.subr.mxu0 0.0
          %1061 = vmatpush1.msra.mxu0 0.0
          %1062 = vmatprep.subr.mxu0 0.0
          %1063 = vmatpush1.msra.mxu0 0.0
          %1064 = vmatprep.subr.mxu0 0.0
          %1065 = vmatpush1.msra.mxu0 0.0
          %1066 = vmatprep.subr.mxu0 0.0
          %1067 = vmatpush1.msra.mxu0 0.0
          %1068 = vmatprep.mubr.f32.mxu0 0.0
          %1069 = vmatmul.mubr.f32.gmra.mrb[0].mxu0 %v957
          %v1070 = vpop.f32.mrb[0].mxu0
          %v1071 = vadd.f32 0.0, %v1070
          %v1072 = vpop.f32.mrb[0].mxu0
          %1073 = vmatprep.mubr.f32.mxu0 0.0
          %1074 = vmatmul.mubr.f32.gmra.mrb[0].mxu0 %v960
          %v1075 = vpop.f32.mrb[0].mxu0
          %v1076 = vadd.f32 0.0, %v1075
          %v1077 = vpop.f32.mrb[0].mxu0
          %1078 = vmatprep.mubr.f32.mxu0 0.0
          %1079 = vmatmul.mubr.f32.gmra.mrb[0].mxu0 %v963
          %v1080 = vpop.f32.mrb[0].mxu0
          %v1081 = vadd.f32 0.0, %v1080
          %v1082 = vpop.f32.mrb[0].mxu0
          %1083 = vmatprep.mubr.f32.mxu0 0.0
          %1084 = vmatmul.mubr.f32.gmra.mrb[0].mxu0 %v966
          %v1085 = vpop.f32.mrb[0].mxu0
          %v1086 = vadd.f32 0.0, %v1085
          %v1087 = vpop.f32.mrb[0].mxu0
          %1088 = vmatprep.mubr.f32.mxu0 0.0
          %1089 = vmatmul.mubr.f32.gmra.mrb[0].mxu0 %v969
          %v1090 = vpop.f32.mrb[0].mxu0
          %v1091 = vadd.f32 0.0, %v1090
          %v1092 = vpop.f32.mrb[0].mxu0
          %1093 = vmatprep.mubr.f32.mxu0 0.0
          %1094 = vmatmul.mubr.f32.gmra.mrb[0].mxu0 %v972
          %v1095 = vpop.f32.mrb[0].mxu0
          %v1096 = vadd.f32 0.0, %v1095
          %v1097 = vpop.f32.mrb[0].mxu0
          %1098 = vmatprep.mubr.f32.mxu0 0.0
          %1099 = vmatmul.mubr.f32.gmra.mrb[0].mxu0 %v975
          %v1100 = vpop.f32.mrb[0].mxu0
          %v1101 = vadd.f32 0.0, %v1100
          %v1102 = vpop.f32.mrb[0].mxu0
          %1103 = vmatprep.mubr.f32.mxu0 0.0
          %1104 = vmatmul.mubr.f32.gmra.mrb[0].mxu0 %v978
          %v1105 = vpop.f32.mrb[0].mxu0
          %v1106 = vadd.f32 0.0, %v1105
          %v1107 = vpop.f32.mrb[0].mxu0
          %1108 = vmatprep.mubr.f32.mxu0 0.0
          %1109 = vmatmul.mubr.f32.gmra.mrb[0].mxu0 %v981
          %v1110 = vpop.f32.mrb[0].mxu0
          %v1111 = vadd.f32 0.0, %v1110
          %v1112 = vpop.f32.mrb[0].mxu0
          %1113 = vmatprep.mubr.f32.mxu0 0.0
          %1114 = vmatmul.mubr.f32.gmra.mrb[0].mxu0 %v984
          %v1115 = vpop.f32.mrb[0].mxu0
          %v1116 = vadd.f32 0.0, %v1115
          %v1117 = vpop.f32.mrb[0].mxu0
          %1118 = vmatprep.mubr.f32.mxu0 0.0
          %1119 = vmatmul.mubr.f32.gmra.mrb[0].mxu0 %v987
          %v1120 = vpop.f32.mrb[0].mxu0
          %v1121 = vadd.f32 0.0, %v1120
          %v1122 = vpop.f32.mrb[0].mxu0
          %1123 = vmatprep.mubr.f32.mxu0 0.0
          %1124 = vmatmul.mubr.f32.gmra.mrb[0].mxu0 %v990
          %v1125 = vpop.f32.mrb[0].mxu0
          %v1126 = vadd.f32 0.0, %v1125
          %v1127 = vpop.f32.mrb[0].mxu0
          %1128 = vmatprep.mubr.f32.mxu0 0.0
          %1129 = vmatmul.mubr.f32.gmra.mrb[0].mxu0 %v993
          %v1130 = vpop.f32.mrb[0].mxu0
          %v1131 = vadd.f32 0.0, %v1130
          %v1132 = vpop.f32.mrb[0].mxu0
          %1133 = vmatprep.mubr.f32.mxu0 0.0
          %1134 = vmatmul.mubr.f32.gmra.mrb[0].mxu0 %v996
          %v1135 = vpop.f32.mrb[0].mxu0
          %v1136 = vadd.f32 0.0, %v1135
          %v1137 = vpop.f32.mrb[0].mxu0
          %1138 = vmatprep.mubr.f32.mxu0 0.0
          %1139 = vmatmul.mubr.f32.gmra.mrb[0].mxu0 %v999
          %v1140 = vpop.f32.mrb[0].mxu0
          %v1141 = vadd.f32 0.0, %v1140
          %v1142 = vpop.f32.mrb[0].mxu0
          %1143 = vmatprep.mubr.f32.mxu0 0.0
          %1144 = vmatmul.mubr.f32.gmra.mrb[0].mxu0 %v1002
          %v1145 = vpop.f32.mrb[0].mxu0
          %v1146 = vadd.f32 0.0, %v1145
          %v1147 = vpop.f32.mrb[0].mxu0
          %1148 = vdwg.mxu0
          %v1149 = vld [vmem:[%s6] sm:$0xff]
          %v1150 = vld [vmem:[%s6 + $0x8] sm:$0xff]
          %v1151 = vld [vmem:[%s6 + $0x10] sm:$0xff]
          %v1152 = vld [vmem:[%s6 + $0x18] sm:$0xff]
          %v1153 = vld [vmem:[%s6 + $0x20] sm:$0xff]
          %v1154 = vld [vmem:[%s6 + $0x28] sm:$0xff]
          %v1155 = vld [vmem:[%s6 + $0x30] sm:$0xff]
          %v1156 = vld [vmem:[%s6 + $0x38] sm:$0xff]
          %v1157 = vld [vmem:[%s6 + $0x40] sm:$0xff]
          %v1158 = vld [vmem:[%s6 + $0x48] sm:$0xff]
          %v1159 = vld [vmem:[%s6 + $0x50] sm:$0xff]
          %v1160 = vld [vmem:[%s6 + $0x58] sm:$0xff]
          %v1161 = vld [vmem:[%s6 + $0x60] sm:$0xff]
          %v1162 = vld [vmem:[%s6 + $0x68] sm:$0xff]
          %v1163 = vld [vmem:[%s6 + $0x70] sm:$0xff]
          %v1164 = vld [vmem:[%s6 + $0x78] sm:$0xff]
          %1166 = vset.pattern.permute.xlu0 0
          %1167 = vperm.xlu0 %1166, %v1149
          %v1168 = vpop.permute.xlu0 %1167
          %1171 = vset.pattern.permute.xlu0 0
          %1172 = vperm.xlu0 %1171, %v1150
          %v1173 = vpop.permute.xlu0 %1172
          %1176 = vset.pattern.permute.xlu0 0
          %1177 = vperm.xlu0 %1176, %v1151
          %v1178 = vpop.permute.xlu0 %1177
          %1181 = vset.pattern.permute.xlu0 0
          %1182 = vperm.xlu0 %1181, %v1152
          %v1183 = vpop.permute.xlu0 %1182
          %1186 = vset.pattern.permute.xlu0 0
          %1187 = vperm.xlu0 %1186, %v1153
          %v1188 = vpop.permute.xlu0 %1187
          %1191 = vset.pattern.permute.xlu0 0
          %1192 = vperm.xlu0 %1191, %v1154
          %v1193 = vpop.permute.xlu0 %1192
          %1196 = vset.pattern.permute.xlu0 0
          %1197 = vperm.xlu0 %1196, %v1155
          %v1198 = vpop.permute.xlu0 %1197
          %1201 = vset.pattern.permute.xlu0 0
          %1202 = vperm.xlu0 %1201, %v1156
          %v1203 = vpop.permute.xlu0 %1202
          %1206 = vset.pattern.permute.xlu0 0
          %1207 = vperm.xlu0 %1206, %v1157
          %v1208 = vpop.permute.xlu0 %1207
          %1211 = vset.pattern.permute.xlu0 0
          %1212 = vperm.xlu0 %1211, %v1158
          %v1213 = vpop.permute.xlu0 %1212
          %1216 = vset.pattern.permute.xlu0 0
          %1217 = vperm.xlu0 %1216, %v1159
          %v1218 = vpop.permute.xlu0 %1217
          %1221 = vset.pattern.permute.xlu0 0
          %1222 = vperm.xlu0 %1221, %v1160
          %v1223 = vpop.permute.xlu0 %1222
          %1226 = vset.pattern.permute.xlu0 0
          %1227 = vperm.xlu0 %1226, %v1161
          %v1228 = vpop.permute.xlu0 %1227
          %1231 = vset.pattern.permute.xlu0 0
          %1232 = vperm.xlu0 %1231, %v1162
          %v1233 = vpop.permute.xlu0 %1232
          %1236 = vset.pattern.permute.xlu0 0
          %1237 = vperm.xlu0 %1236, %v1163
          %v1238 = vpop.permute.xlu0 %1237
          %1241 = vset.pattern.permute.xlu0 0
          %1242 = vperm.xlu0 %1241, %v1164
          %v1243 = vpop.permute.xlu0 %1242
          %v1245 = vmul.f32 %v1071, %v1168
          %v1246 = vmul.f32 %v1076, %v1173
          %v1247 = vmul.f32 %v1081, %v1178
          %v1248 = vmul.f32 %v1086, %v1183
          %v1249 = vmul.f32 %v1091, %v1188
          %v1250 = vmul.f32 %v1096, %v1193
          %v1251 = vmul.f32 %v1101, %v1198
          %v1252 = vmul.f32 %v1106, %v1203
          %v1253 = vmul.f32 %v1111, %v1208
          %v1254 = vmul.f32 %v1116, %v1213
          %v1255 = vmul.f32 %v1121, %v1218
          %v1256 = vmul.f32 %v1126, %v1223
          %v1257 = vmul.f32 %v1131, %v1228
          %v1258 = vmul.f32 %v1136, %v1233
          %v1259 = vmul.f32 %v1141, %v1238
          %v1260 = vmul.f32 %v1146, %v1243
          %1261 = vst [vmem:[#allocation8] sm:$0xff] %v1245
          %1262 = vst [vmem:[#allocation8 + $0x8] sm:$0xff] %v1246
          %1263 = vst [vmem:[#allocation8 + $0x10] sm:$0xff] %v1247
          %1264 = vst [vmem:[#allocation8 + $0x18] sm:$0xff] %v1248
          %1265 = vst [vmem:[#allocation8 + $0x20] sm:$0xff] %v1249
          %1266 = vst [vmem:[#allocation8 + $0x28] sm:$0xff] %v1250
          %1267 = vst [vmem:[#allocation8 + $0x30] sm:$0xff] %v1251
          %1268 = vst [vmem:[#allocation8 + $0x38] sm:$0xff] %v1252
          %1269 = vst [vmem:[#allocation8 + $0x40] sm:$0xff] %v1253
          %1270 = vst [vmem:[#allocation8 + $0x48] sm:$0xff] %v1254
          %1271 = vst [vmem:[#allocation8 + $0x50] sm:$0xff] %v1255
          %1272 = vst [vmem:[#allocation8 + $0x58] sm:$0xff] %v1256
          %1273 = vst [vmem:[#allocation8 + $0x60] sm:$0xff] %v1257
          %1274 = vst [vmem:[#allocation8 + $0x68] sm:$0xff] %v1258
          %1275 = vst [vmem:[#allocation8 + $0x70] sm:$0xff] %v1259
          %1276 = vst [vmem:[#allocation8 + $0x78] sm:$0xff] %v1260
          %v1277 = vmul.f32 %v1245, %v1245
          %v1278 = vmul.f32 %v1246, %v1246
          %v1279 = vmul.f32 %v1247, %v1247
          %v1280 = vmul.f32 %v1248, %v1248
          %v1281 = vmul.f32 %v1249, %v1249
          %v1282 = vmul.f32 %v1250, %v1250
          %v1283 = vmul.f32 %v1251, %v1251
          %v1284 = vmul.f32 %v1252, %v1252
          %v1285 = vmul.f32 %v1253, %v1253
          %v1286 = vmul.f32 %v1254, %v1254
          %v1287 = vmul.f32 %v1255, %v1255
          %v1288 = vmul.f32 %v1256, %v1256
          %v1289 = vmul.f32 %v1257, %v1257
          %v1290 = vmul.f32 %v1258, %v1258
          %v1291 = vmul.f32 %v1259, %v1259
          %v1292 = vmul.f32 %v1260, %v1260
          %1293 = vadd.xlane.f32.xlu0 %v1277
          %v1294 = vpop.xlane.xlu0 %1293
          %1295 = vadd.xlane.f32.xlu0 %v1278
          %v1296 = vpop.xlane.xlu0 %1295
          %1297 = vadd.xlane.f32.xlu0 %v1279
          %v1298 = vpop.xlane.xlu0 %1297
          %1299 = vadd.xlane.f32.xlu0 %v1280
          %v1300 = vpop.xlane.xlu0 %1299
          %1301 = vadd.xlane.f32.xlu0 %v1281
          %v1302 = vpop.xlane.xlu0 %1301
          %1303 = vadd.xlane.f32.xlu0 %v1282
          %v1304 = vpop.xlane.xlu0 %1303
          %1305 = vadd.xlane.f32.xlu0 %v1283
          %v1306 = vpop.xlane.xlu0 %1305
          %1307 = vadd.xlane.f32.xlu0 %v1284
          %v1308 = vpop.xlane.xlu0 %1307
          %1309 = vadd.xlane.f32.xlu0 %v1285
          %v1310 = vpop.xlane.xlu0 %1309
          %1311 = vadd.xlane.f32.xlu0 %v1286
          %v1312 = vpop.xlane.xlu0 %1311
          %1313 = vadd.xlane.f32.xlu0 %v1287
          %v1314 = vpop.xlane.xlu0 %1313
          %1315 = vadd.xlane.f32.xlu0 %v1288
          %v1316 = vpop.xlane.xlu0 %1315
          %1317 = vadd.xlane.f32.xlu0 %v1289
          %v1318 = vpop.xlane.xlu0 %1317
          %1319 = vadd.xlane.f32.xlu0 %v1290
          %v1320 = vpop.xlane.xlu0 %1319
          %1321 = vadd.xlane.f32.xlu0 %v1291
          %v1322 = vpop.xlane.xlu0 %1321
          %1323 = vadd.xlane.f32.xlu0 %v1292
          %v1324 = vpop.xlane.xlu0 %1323
          %v1341 = vlaneseq
          %v1342 = vand.u32 %v1341, 127
          %v1343 = vlaneseq
          %v1344 = vshrl.u32 %v1343, 7
          %v1345 = vsub.s32 %v1342, %v1344
          %v1346 = vrot.slane %v1294, %v1345
          %v1347 = vadd.s32 %v1342, 4294967288
          %v1348 = vlaneseq
          %v1349 = vshrl.u32 %v1348, 7
          %v1350 = vsub.s32 %v1347, %v1349
          %v1351 = vrot.slane %v1296, %v1350
          %vm1352 = vcmask 130112
          %v1353 = vsel %vm1352, %v1351, %v1346
          %v1354 = vadd.s32 %v1342, 4294967280
          %v1355 = vlaneseq
          %v1356 = vshrl.u32 %v1355, 7
          %v1357 = vsub.s32 %v1354, %v1356
          %v1358 = vrot.slane %v1298, %v1357
          %vm1359 = vcmask 195712
          %v1360 = vsel %vm1359, %v1358, %v1353
          %v1361 = vadd.s32 %v1342, 4294967272
          %v1362 = vlaneseq
          %v1363 = vshrl.u32 %v1362, 7
          %v1364 = vsub.s32 %v1361, %v1363
          %v1365 = vrot.slane %v1300, %v1364
          %vm1366 = vcmask 261312
          %v1367 = vsel %vm1366, %v1365, %v1360
          %v1368 = vadd.s32 %v1342, 4294967264
          %v1369 = vlaneseq
          %v1370 = vshrl.u32 %v1369, 7
          %v1371 = vsub.s32 %v1368, %v1370
          %v1372 = vrot.slane %v1302, %v1371
          %vm1373 = vcmask 326912
          %v1374 = vsel %vm1373, %v1372, %v1367
          %v1375 = vadd.s32 %v1342, 4294967256
          %v1376 = vlaneseq
          %v1377 = vshrl.u32 %v1376, 7
          %v1378 = vsub.s32 %v1375, %v1377
          %v1379 = vrot.slane %v1304, %v1378
          %vm1380 = vcmask 392512
          %v1381 = vsel %vm1380, %v1379, %v1374
          %v1382 = vadd.s32 %v1342, 4294967248
          %v1383 = vlaneseq
          %v1384 = vshrl.u32 %v1383, 7
          %v1385 = vsub.s32 %v1382, %v1384
          %v1386 = vrot.slane %v1306, %v1385
          %vm1387 = vcmask 458112
          %v1388 = vsel %vm1387, %v1386, %v1381
          %v1389 = vadd.s32 %v1342, 4294967240
          %v1390 = vlaneseq
          %v1391 = vshrl.u32 %v1390, 7
          %v1392 = vsub.s32 %v1389, %v1391
          %v1393 = vrot.slane %v1308, %v1392
          %vm1394 = vcmask 523712
          %v1395 = vsel %vm1394, %v1393, %v1388
          %v1396 = vadd.s32 %v1342, 4294967232
          %v1397 = vlaneseq
          %v1398 = vshrl.u32 %v1397, 7
          %v1399 = vsub.s32 %v1396, %v1398
          %v1400 = vrot.slane %v1310, %v1399
          %vm1401 = vcmask 589312
          %v1402 = vsel %vm1401, %v1400, %v1395
          %v1403 = vadd.s32 %v1342, 4294967224
          %v1404 = vlaneseq
          %v1405 = vshrl.u32 %v1404, 7
          %v1406 = vsub.s32 %v1403, %v1405
          %v1407 = vrot.slane %v1312, %v1406
          %vm1408 = vcmask 654912
          %v1409 = vsel %vm1408, %v1407, %v1402
          %v1410 = vadd.s32 %v1342, 4294967216
          %v1411 = vlaneseq
          %v1412 = vshrl.u32 %v1411, 7
          %v1413 = vsub.s32 %v1410, %v1412
          %v1414 = vrot.slane %v1314, %v1413
          %vm1415 = vcmask 720512
          %v1416 = vsel %vm1415, %v1414, %v1409
          %v1417 = vadd.s32 %v1342, 4294967208
          %v1418 = vlaneseq
          %v1419 = vshrl.u32 %v1418, 7
          %v1420 = vsub.s32 %v1417, %v1419
          %v1421 = vrot.slane %v1316, %v1420
          %vm1422 = vcmask 786112
          %v1423 = vsel %vm1422, %v1421, %v1416
          %v1424 = vadd.s32 %v1342, 4294967200
          %v1425 = vlaneseq
          %v1426 = vshrl.u32 %v1425, 7
          %v1427 = vsub.s32 %v1424, %v1426
          %v1428 = vrot.slane %v1318, %v1427
          %vm1429 = vcmask 851712
          %v1430 = vsel %vm1429, %v1428, %v1423
          %v1431 = vadd.s32 %v1342, 4294967192
          %v1432 = vlaneseq
          %v1433 = vshrl.u32 %v1432, 7
          %v1434 = vsub.s32 %v1431, %v1433
          %v1435 = vrot.slane %v1320, %v1434
          %vm1436 = vcmask 917312
          %v1437 = vsel %vm1436, %v1435, %v1430
          %v1438 = vadd.s32 %v1342, 4294967184
          %v1439 = vlaneseq
          %v1440 = vshrl.u32 %v1439, 7
          %v1441 = vsub.s32 %v1438, %v1440
          %v1442 = vrot.slane %v1322, %v1441
          %vm1443 = vcmask 982912
          %v1444 = vsel %vm1443, %v1442, %v1437
          %v1445 = vadd.s32 %v1342, 4294967176
          %v1446 = vlaneseq
          %v1447 = vshrl.u32 %v1446, 7
          %v1448 = vsub.s32 %v1445, %v1447
          %v1449 = vrot.slane %v1324, %v1448
          %vm1450 = vcmask 1048512
          %v1451 = vsel %vm1450, %v1449, %v1444
          %1453 = vst [vmem:[#allocation10] sm:$0x1] %v1451
        $region83: #{tpu_custom_call.1} parent=66 // pred_fallthru
          _
        // Predicated region
        $region84: #{tpu_custom_call.1} parent=66 // pred_check
          %p1454 = pneg %p196
        $region85: #{tpu_custom_call.1} parent=66 // pred_check_branch
          %1456 = sbr.rel (%p1454) target = $region87
        $region86: #{tpu_custom_call.1} parent=66 // pred_region
          %s1458 = ssub.s32 256, 256
          %1459 = vsyncadd [#allocation6], %s1458
          %s1460 = sshll.u32 [#allocation7], 4
          %s1461 = int_to_ptr.vmem [resolvable:$true] %s1460
          %1466 = dma.vmem_to_hbm [thread:$0]  %s1461, 256, %s7, [#allocation6], 128, 128, 8
        $region87: #{tpu_custom_call.1} parent=66 // pred_fallthru
          _
        // Predicated region
        $region88: #{tpu_custom_call.1} parent=66 // pred_check
          %p1467 = pneg %p217
        $region89: #{tpu_custom_call.1} parent=66 // pred_check_branch
          %1469 = sbr.rel (%p1467) target = $region91
        $region90: #{tpu_custom_call.1} parent=66 // pred_region
          %s1471 = ssub.s32 2048, 2048
          %1472 = vsyncadd [#allocation9], %s1471
          %s1473 = sshll.u32 [#allocation8], 4
          %s1474 = int_to_ptr.vmem [resolvable:$true] %s1473
          %1479 = dma.vmem_to_hbm [thread:$0]  %s1474, 2048, %s8, [#allocation9], 128, 128, 8
        $region91: #{tpu_custom_call.1} parent=66 // pred_fallthru
          _
        // Predicated region
        $region92: #{tpu_custom_call.1} parent=66 // pred_check
          %p1480 = pneg %p238
        $region93: #{tpu_custom_call.1} parent=66 // pred_check_branch
          %1482 = sbr.rel (%p1480) target = $region95
        $region94: #{tpu_custom_call.1} parent=66 // pred_region
          %s1484 = ssub.s32 16, 16
          %1485 = vsyncadd [#allocation9], %s1484
          %s1487 = sshll.u32 [#allocation10], 4
          %s1488 = int_to_ptr.vmem [resolvable:$true] %s1487
          %1490 = dma.vmem_to_hbm [thread:$0]  %s1488, 16, %s9, [#allocation9]
        $region95: #{tpu_custom_call.1} parent=66 // pred_fallthru
          _
        // Predicated region
        $region96: #{tpu_custom_call.1} parent=66 // pred_check
          %p1491 = pneg %p196
        $region97: #{tpu_custom_call.1} parent=66 // pred_check_branch
          %1493 = sbr.rel (%p1491) target = $region99
        $region98: #{tpu_custom_call.1} parent=66 // pred_region
          %1494 = dma.done [#allocation6], 256
        $region99: #{tpu_custom_call.1} parent=66 // pred_fallthru
          _
        // Predicated region
        $region100: #{tpu_custom_call.1} parent=66 // pred_check
          %p1495 = pneg %p217
        $region101: #{tpu_custom_call.1} parent=66 // pred_check_branch
          %1497 = sbr.rel (%p1495) target = $region103
        $region102: #{tpu_custom_call.1} parent=66 // pred_region
          %1498 = dma.done [#allocation9], 2048
        $region103: #{tpu_custom_call.1} parent=66 // pred_fallthru
          _
        // Predicated region
        $region104: #{tpu_custom_call.1} parent=66 // pred_check
          %p1499 = pneg %p238
        $region105: #{tpu_custom_call.1} parent=66 // pred_check_branch
          %1501 = sbr.rel (%p1499) target = $region107
        $region106: #{tpu_custom_call.1} parent=66 // pred_region
          %1502 = dma.done [#allocation9], 16
        $region107: #{tpu_custom_call.1} parent=66 // pred_fallthru
          _
      $region67: #{tpu_custom_call.1} parent=5 // pred_fallthru
        _
      %p1503 = scmp.le.s32.totalorder 2, %s21
      // Predicated region
      $region108: #{tpu_custom_call.1} parent=5 // pred_check
        %p1504 = pneg %p1503
      $region109: #{tpu_custom_call.1} parent=5 // pred_check_branch
        %1506 = sbr.rel (%p1504) target = $region111
      $region110: #{tpu_custom_call.1} parent=5 // pred_region
        %s1507 = ssub.s32 %s21, 2
      $region111: #{tpu_custom_call.1} parent=5 // pred_fallthru
        _
    $region6: #{tpu_custom_call.1} parent=1 // loop_footer
      %s25 = sadd.s32 1, %s21
    $region7: #{tpu_custom_call.1} parent=1 // loop_footer_branch
      %20 = sbr.rel target = $region3
    $region8: #{tpu_custom_call.1} parent=1 // loop_exit
      _
    %1508 = vsyncpa [#allocation5], 1
    %s1509 = scalar_lea.sflag [#allocation5], 1
    %1510 = vsyncpa %s1509, 1
    %1511 = vsyncpa [#allocation6], 1
    %s1512 = scalar_lea.sflag [#allocation6], 1
    %1513 = vsyncpa %s1512, 1
    %1514 = vsyncpa [#allocation9], 1

</llo_original>
